<compile_context>
chip_gen: v6e
topology: v6e:2x2x1
jax: 0.10.0
libtpu: 0.0.40
codegen_flags: <defaults>
</compile_context>

<pallas_src>
import functools

import jax
import jax.numpy as jnp
from jax import lax
from jax.experimental import pallas as pl
from jax.experimental.pallas import tpu as pltpu

EPS = 1e-6
LANE = 128


def _round_up(n, m):
    return ((n + m - 1) // m) * m


# ----------------------------------------------------------------------------
# In-kernel helpers (traced inside the Pallas kernel)
# ----------------------------------------------------------------------------
def _gelu(x):
    # Exact (erf) GELU == nn.GELU() default.
    return 0.5 * x * (1.0 + lax.erf(x * 0.7071067811865476))


def _masked_layernorm(x, g, b, mask, inv_n):
    """LayerNorm over the lane-padded last dim; statistics use only real
    channels (mask = 1.0 real / 0.0 pad). Padded outputs are exactly 0 because
    gamma/beta are zero-padded."""
    xm = x * mask
    mu = jnp.sum(xm, axis=-1, keepdims=True) * inv_n
    d = (x - mu) * mask
    var = jnp.sum(d * d, axis=-1, keepdims=True) * inv_n
    return d * lax.rsqrt(var + EPS) * g + b


# ----------------------------------------------------------------------------
# Fused kernel: patch-embed + all mixer blocks + head
# ----------------------------------------------------------------------------
def mixer_fused_kernel(patches_ref, w_patch_ref,
                       ln1_ref, w1_ref, b1_ref, w2_ref, b2_ref,
                       ln2_ref, w3_ref, b3_ref, w4_ref, b4_ref,
                       lnf_ref, w_fc_ref, b_fc_ref,
                       logits_ref, x_ref, *, c_real, T, bb):
    l = pl.program_id(1)
    n_layers = pl.num_programs(1)
    rows, cp = x_ref.shape                      # rows = T * bb (token-major)
    bbc = bb * cp

    # Hoisted loop-invariant work (once per grid step, not per batch element).
    mask = (lax.broadcasted_iota(jnp.int32, (1, cp), 1) < c_real).astype(jnp.float32)
    inv_c = jnp.float32(1.0 / c_real)

    # ---- patch embedding (first layer step only; activation stays in VMEM) --
    @pl.when(l == 0)
    def _embed():
        x_ref[...] = jnp.dot(patches_ref[0], w_patch_ref[...],
                             preferred_element_type=jnp.float32)

    x = x_ref[...]                              # (rows, cp) f32 residual stream

    # ---------------------------- token mixing ------------------------------
    ln1 = ln1_ref[0]                            # (2, cp) : [gamma; beta]
    y = _masked_layernorm(x, ln1[0:1], ln1[1:2], mask, inv_c).astype(jnp.bfloat16)
    # rows view (T*bb, Cp) -> wide view (T, bb*Cp); identity when bb == 1.
    yw = y if bb == 1 else y.reshape(T, bbc)
    # h[k, (b,c)] = sum_t w1[t, k] * y[t, (b,c)]   -- single big matmul
    h = lax.dot_general(w1_ref[0], yw, (((0,), (0,)), ((), ())),
                        preferred_element_type=jnp.float32)        # (tokp, bb*Cp)
    h = _gelu(h + b1_ref[0]).astype(jnp.bfloat16)
    # tmix[t, (b,c)] = sum_k w2[k, t] * h[k, (b,c)]
    tmix = lax.dot_general(w2_ref[0], h, (((0,), (0,)), ((), ())),
                           preferred_element_type=jnp.float32)     # (T, bb*Cp)
    tmix = tmix + b2_ref[0]
    if bb > 1:
        tmix = tmix.reshape(rows, cp)           # wide -> rows view
    # mask keeps padded channel lanes of the residual exactly zero
    x = x + tmix * mask

    # --------------------------- channel mixing -----------------------------
    ln2 = ln2_ref[0]
    y = _masked_layernorm(x, ln2[0:1], ln2[1:2], mask, inv_c).astype(jnp.bfloat16)
    h = jnp.dot(y, w3_ref[0], preferred_element_type=jnp.float32) + b3_ref[0]
    h = _gelu(h).astype(jnp.bfloat16)
    x = x + jnp.dot(h, w4_ref[0], preferred_element_type=jnp.float32) + b4_ref[0]
    x_ref[...] = x

    # ------------------ classifier head, fused on last layer ----------------
    @pl.when(l == n_layers - 1)
    def _head():
        lnf = lnf_ref[...]
        yh = _masked_layernorm(x, lnf[0:1], lnf[1:2], mask, inv_c)
        if bb == 1:
            m = jnp.mean(yh, axis=0, keepdims=True)                # (1, cp)
        else:
            m = jnp.mean(yh.reshape(T, bb, cp), axis=0)            # (bb, cp)
        logits_ref[0] = (jnp.dot(m.astype(jnp.bfloat16), w_fc_ref[...],
                                 preferred_element_type=jnp.float32)
                         + b_fc_ref[...])


# ----------------------------------------------------------------------------
# Generation-aware sizing helpers
# ----------------------------------------------------------------------------
def _tpu_vmem_budget():
    """VMEM limit for the kernel: ~96 MiB on 128 MiB parts (v5e/v6e),
    48 MiB on 64 MiB parts (v7x) or when detection fails."""
    try:
        cap = int(pltpu.get_tpu_info().vmem_capacity_bytes)
    except Exception:
        cap = 64 * 1024 * 1024
    if cap >= 100 * 1024 * 1024:
        return 96 * 1024 * 1024
    return 48 * 1024 * 1024


def _choose_bb(B, T, cp, dinp, ncp, per_layer_w_bytes, resident_bytes, budget):
    """Batch elements per grid step: as large as the VMEM budget allows,
    but keeping >= 2 batch-grid steps (megacore) and dividing B exactly."""
    per_b = T * cp * 4 + 2 * T * dinp * 2 + 2 * ncp * 4   # scratch + 2x patches + 2x logits
    avail = budget - resident_bytes - 2 * per_layer_w_bytes
    cap_vmem = max(1, int(0.5 * avail) // per_b)
    cap = max(1, min(cap_vmem, 32, B // 2 if B >= 2 else B))
    for bb in range(cap, 0, -1):
        if B % bb == 0:
            return bb
    return 1


# ----------------------------------------------------------------------------
# Forward wrapper
# ----------------------------------------------------------------------------
def mlp_mixer_forward(x_nchw, params):
    B, cin, H, W = x_nchw.shape
    P = params["patch_size"]
    Th, Tw = H // P, W // P
    T = Th * Tw
    s = params["stacked"]
    L, _, cp = s["ln1"].shape
    tokp = s["w1"].shape[2]
    chp = s["w3"].shape[2]
    dinp = params["w_patch"].shape[0]
    ncp = params["w_fc"].shape[1]
    hidden = params["hidden_dim"]

    per_layer_w = 2 * (T * tokp + tokp * T + cp * chp + chp * cp) \
        + 4 * (4 * cp + tokp + T + chp + cp)
    resident = 2 * (dinp * cp * 2) + 2 * (2 * cp * 4 + cp * ncp * 2 + ncp * 4)
    budget = _tpu_vmem_budget()
    bb = _choose_bb(B, T, cp, dinp, ncp, per_layer_w, resident, budget)
    nb = B // bb

    # Patch-extraction glue: one XLA transpose producing token-major rows per
    # batch block, (c, kh, kw)-fast to match the flattened Conv2d weight.
    din = cin * P * P
    pat = x_nchw.reshape(nb, bb, cin, Th, P, Tw, P)
    pat = pat.transpose(0, 3, 5, 1, 2, 4, 6).reshape(nb, T * bb, din)
    pat = pat.astype(jnp.bfloat16)
    if dinp > din:
        pat = jnp.pad(pat, ((0, 0), (0, 0), (0, dinp - din)))   # lane-dense K

    kernel = functools.partial(mixer_fused_kernel, c_real=hidden, T=T, bb=bb)

    bmap3 = lambda bi, l: (bi, 0, 0)     # batch-indexed, resident across layers
    lmap3 = lambda bi, l: (l, 0, 0)      # streams per-layer weights
    cmap2 = lambda bi, l: (0, 0)         # fully resident (fetched once)

    logits = pl.pallas_call(
        kernel,
        grid=(nb, L),
        in_specs=[
            pl.BlockSpec((1, T * bb, dinp), bmap3),   # patches
            pl.BlockSpec((dinp, cp), cmap2),          # patch-embed weight
            pl.BlockSpec((1, 2, cp), lmap3),          # ln1 gamma/beta
            pl.BlockSpec((1, T, tokp), lmap3),        # w1
            pl.BlockSpec((1, tokp, 1), lmap3),        # b1 (column broadcast)
            pl.BlockSpec((1, tokp, T), lmap3),        # w2
            pl.BlockSpec((1, T, 1), lmap3),           # b2 (column broadcast)
            pl.BlockSpec((1, 2, cp), lmap3),          # ln2 gamma/beta
            pl.BlockSpec((1, cp, chp), lmap3),        # w3
            pl.BlockSpec((1, 1, chp), lmap3),         # b3 (lane-dense)
            pl.BlockSpec((1, chp, cp), lmap3),        # w4
            pl.BlockSpec((1, 1, cp), lmap3),          # b4 (lane-dense)
            pl.BlockSpec((2, cp), cmap2),             # final LN gamma/beta
            pl.BlockSpec((cp, ncp), cmap2),           # fc weight
            pl.BlockSpec((1, ncp), cmap2),            # fc bias
        ],
        out_specs=pl.BlockSpec((1, bb, ncp), bmap3),
        out_shape=jax.ShapeDtypeStruct((nb, bb, ncp), jnp.float32),
        scratch_shapes=[pltpu.VMEM((T * bb, cp), jnp.float32)],   # residual stream
        compiler_params=pltpu.CompilerParams(
            dimension_semantics=("parallel", "arbitrary"),
            vmem_limit_bytes=budget),
    )(pat, params["w_patch"],
      s["ln1"], s["w1"], s["b1"], s["w2"], s["b2"],
      s["ln2"], s["w3"], s["b3"], s["w4"], s["b4"],
      params["ln_f"], params["w_fc"], params["b_fc"])

    return logits.reshape(B, ncp)[:, :params["num_classes"]]


# ----------------------------------------------------------------------------
# Parameter packing: pad to lane-dense shapes, bf16 matmul weights, stack layers
# ----------------------------------------------------------------------------
def pack_params(raw, *, patch_size, hidden, num_classes):
    f32, bf = jnp.float32, jnp.bfloat16
    cp = _round_up(hidden, LANE)
    ncp = _round_up(num_classes, LANE)
    blocks = raw["blocks"]
    T, tok = blocks[0]["w1"].shape
    ch = blocks[0]["w3"].shape[1]
    tokp = _round_up(tok, LANE)
    chp = _round_up(ch, LANE)
    din = raw["w_patch"].shape[0]
    dinp = _round_up(din, LANE)

    def pad1(a, n):
        return jnp.pad(a, (0, n - a.shape[0]))

    def pad2(a, r, c):
        return jnp.pad(a, ((0, r - a.shape[0]), (0, c - a.shape[1])))

    def stack(fn, dtype):
        return jnp.stack([fn(p) for p in blocks]).astype(dtype)

    stacked = dict(
        ln1=stack(lambda p: jnp.stack([pad1(p["ln1_g"], cp),
                                       pad1(p["ln1_b"], cp)]), f32),    # (L,2,cp)
        w1=stack(lambda p: pad2(p["w1"], T, tokp), bf),                 # (L,T,tokp)
        b1=stack(lambda p: pad2(p["b1"][:, None], tokp, 1), f32),       # (L,tokp,1)
        w2=stack(lambda p: pad2(p["w2"], tokp, T), bf),                 # (L,tokp,T)
        b2=stack(lambda p: pad2(p["b2"][:, None], T, 1), f32),          # (L,T,1)
        ln2=stack(lambda p: jnp.stack([pad1(p["ln2_g"], cp),
                                       pad1(p["ln2_b"], cp)]), f32),
        w3=stack(lambda p: pad2(p["w3"], cp, chp), bf),                 # (L,cp,chp)
        b3=stack(lambda p: pad2(p["b3"][None, :], 1, chp), f32),        # (L,1,chp)
        w4=stack(lambda p: pad2(p["w4"], chp, cp), bf),                 # (L,chp,cp)
        b4=stack(lambda p: pad2(p["b4"][None, :], 1, cp), f32),         # (L,1,cp)
    )
    return dict(
        patch_size=patch_size, hidden_dim=hidden, num_classes=num_classes,
        w_patch=pad2(raw["w_patch"], dinp, cp).astype(bf),              # (dinp,cp)
        stacked=stacked,
        ln_f=jnp.stack([pad1(raw["ln_g"], cp),
                        pad1(raw["ln_b"], cp)]).astype(f32),            # (2,cp)
        w_fc=pad2(raw["w_fc"], cp, ncp).astype(bf),
        b_fc=pad2(raw["b_fc"][None, :], 1, ncp).astype(f32),
    )


# ----------------------------------------------------------------------------
# Pure-JAX reference (same numerical recipe: bf16 matmul operands, f32 accum)
# ----------------------------------------------------------------------------
def mlp_mixer_reference(x_nchw, raw, patch_size):
    B, cin, H, W = x_nchw.shape
    P = patch_size
    T = (H // P) * (W // P)

    def mm(a, w):
        return jnp.einsum('...ij,jk->...ik', a.astype(jnp.bfloat16),
                          w.astype(jnp.bfloat16),
                          preferred_element_type=jnp.float32)

    def ln(x, g, b):
        mu = jnp.mean(x, axis=-1, keepdims=True)
        var = jnp.mean((x - mu) ** 2, axis=-1, keepdims=True)
        return (x - mu) * lax.rsqrt(var + EPS) * g + b

    patches = x_nchw.reshape(B, cin, H // P, P, W // P, P)
    patches = patches.transpose(0, 2, 4, 1, 3, 5).reshape(B, T, cin * P * P)
    x = mm(patches, raw["w_patch"])
    for p in raw["blocks"]:
        y = jnp.swapaxes(ln(x, p["ln1_g"], p["ln1_b"]), 1, 2)          # (B, C, T)
        h = _gelu(mm(y, p["w1"]) + p["b1"])
        h = mm(h, p["w2"]) + p["b2"]
        x = x + jnp.swapaxes(h, 1, 2)
        y = ln(x, p["ln2_g"], p["ln2_b"])
        h = _gelu(mm(y, p["w3"]) + p["b3"])
        x = x + mm(h, p["w4"]) + p["b4"]
    y = ln(x, raw["ln_g"], raw["ln_b"])
    m = jnp.mean(y, axis=1)
    return mm(m, raw["w_fc"]) + raw["b_fc"]


# ----------------------------------------------------------------------------
# Main
# ----------------------------------------------------------------------------
if __name__ == "__main__":
    key = jax.random.PRNGKey(0)

    B = 2
    image_size = 16
    patch_size = 4
    hidden_dim = 32
    tokens_mlp_dim = 64
    channels_mlp_dim = 64
    num_classes = 10
    num_blocks = 2
    T = (image_size // patch_size) ** 2            # 16 tokens

    keys = iter(jax.random.split(key, 8 + 12 * num_blocks))

    def rnd(shape, scale=0.05):
        return scale * jax.random.normal(next(keys), shape, dtype=jnp.float32)

    # Conv2d(3, hidden, kernel=P, stride=P, bias=False) weight: (hidden, 3, P, P)
    conv_w = rnd((hidden_dim, 3, patch_size, patch_size))

    raw = dict(
        w_patch=conv_w.reshape(hidden_dim, -1).T,  # (3*P*P, hidden)
        ln_g=1.0 + rnd((hidden_dim,), 0.02),
        ln_b=rnd((hidden_dim,), 0.02),
        w_fc=rnd((hidden_dim, num_classes)),
        b_fc=rnd((num_classes,)),
        blocks=[],
    )
    for _ in range(num_blocks):
        raw["blocks"].append(dict(
            ln1_g=1.0 + rnd((hidden_dim,), 0.02),
            ln1_b=rnd((hidden_dim,), 0.02),
            w1=rnd((T, tokens_mlp_dim)), b1=rnd((tokens_mlp_dim,)),
            w2=rnd((tokens_mlp_dim, T)), b2=rnd((T,)),
            ln2_g=1.0 + rnd((hidden_dim,), 0.02),
            ln2_b=rnd((hidden_dim,), 0.02),
            w3=rnd((hidden_dim, channels_mlp_dim)), b3=rnd((channels_mlp_dim,)),
            w4=rnd((channels_mlp_dim, hidden_dim)), b4=rnd((hidden_dim,)),
        ))

    params = pack_params(raw, patch_size=patch_size, hidden=hidden_dim,
                         num_classes=num_classes)

    x = jax.random.normal(next(keys), (B, 3, image_size, image_size), jnp.float32)

    out = jax.block_until_ready(mlp_mixer_forward(x, params))
    ref = jax.block_until_ready(mlp_mixer_reference(x, raw, patch_size))

    assert out.shape == (B, num_classes)
    assert jnp.allclose(out, ref, atol=2e-3, rtol=2e-3), (
        "mismatch vs reference: max |diff| = "
        f"{jnp.max(jnp.abs(out - ref))}")
    print("KERNEL_OK")
</pallas_src>

<mosaic_0001>
module attributes {stable_mosaic.version = 11 : i64} {
  func.func @mixer_fused_kernel(%arg0: i32, %arg1: i32, %arg2: memref<1x16x128xbf16, #tpu.memory_space<vmem>>, %arg3: memref<128x128xbf16, #tpu.memory_space<vmem>>, %arg4: memref<1x2x128xf32, #tpu.memory_space<vmem>>, %arg5: memref<1x16x128xbf16, #tpu.memory_space<vmem>>, %arg6: memref<1x128x1xf32, #tpu.memory_space<vmem>>, %arg7: memref<1x128x16xbf16, #tpu.memory_space<vmem>>, %arg8: memref<1x16x1xf32, #tpu.memory_space<vmem>>, %arg9: memref<1x2x128xf32, #tpu.memory_space<vmem>>, %arg10: memref<1x128x128xbf16, #tpu.memory_space<vmem>>, %arg11: memref<1x1x128xf32, #tpu.memory_space<vmem>>, %arg12: memref<1x128x128xbf16, #tpu.memory_space<vmem>>, %arg13: memref<1x1x128xf32, #tpu.memory_space<vmem>>, %arg14: memref<2x128xf32, #tpu.memory_space<vmem>>, %arg15: memref<128x128xbf16, #tpu.memory_space<vmem>>, %arg16: memref<1x128xf32, #tpu.memory_space<vmem>>, %arg17: memref<1x1x128xf32, #tpu.memory_space<vmem>>, %arg18: memref<16x128xf32, #tpu.memory_space<vmem>>) attributes {dimension_semantics = [#tpu.dimension_semantics<parallel>, #tpu.dimension_semantics<arbitrary>], iteration_bounds = array<i64: 2, 2>, scalar_prefetch = 0 : i64, scratch_operands = 1 : i64, tpu.core_type = #tpu.core_type<tc>, window_params = [{transform_indices = @transform_0, window_bounds = array<i64: 1, 16, 128>}, {pipeline_mode = #tpu.pipeline_mode<synchronous>, transform_indices = @transform_1, window_bounds = array<i64: 128, 128>}, {transform_indices = @transform_2, window_bounds = array<i64: 1, 2, 128>}, {transform_indices = @transform_3, window_bounds = array<i64: 1, 16, 128>}, {transform_indices = @transform_4, window_bounds = array<i64: 1, 128, 1>}, {transform_indices = @transform_5, window_bounds = array<i64: 1, 128, 16>}, {transform_indices = @transform_6, window_bounds = array<i64: 1, 16, 1>}, {transform_indices = @transform_7, window_bounds = array<i64: 1, 2, 128>}, {transform_indices = @transform_8, window_bounds = array<i64: 1, 128, 128>}, {transform_indices = @transform_9, window_bounds = array<i64: 1, 1, 128>}, {transform_indices = @transform_10, window_bounds = array<i64: 1, 128, 128>}, {transform_indices = @transform_11, window_bounds = array<i64: 1, 1, 128>}, {pipeline_mode = #tpu.pipeline_mode<synchronous>, transform_indices = @transform_12, window_bounds = array<i64: 2, 128>}, {pipeline_mode = #tpu.pipeline_mode<synchronous>, transform_indices = @transform_13, window_bounds = array<i64: 128, 128>}, {pipeline_mode = #tpu.pipeline_mode<synchronous>, transform_indices = @transform_14, window_bounds = array<i64: 1, 128>}, {transform_indices = @transform_15, window_bounds = array<i64: 1, 1, 128>}]} {
    %0 = tpu.iota {dimensions = array<i32: 1>} : vector<1x128xi32>
    %c32_i32 = arith.constant 32 : i32
    %1 = vector.broadcast %c32_i32 : i32 to vector<1x128xi32>
    %2 = arith.cmpi slt, %0, %1 : vector<1x128xi32>
    %3 = arith.extui %2 : vector<1x128xi1> to vector<1x128xi32>
    %4 = arith.sitofp %3 : vector<1x128xi32> to vector<1x128xf32>
    %c0_i32 = arith.constant 0 : i32
    %5 = arith.cmpi eq, %arg1, %c0_i32 : i32
    %6 = arith.extui %5 : i1 to i32
    %c0_i32_0 = arith.constant 0 : i32
    %7 = arith.cmpi ne, %6, %c0_i32_0 : i32
    scf.if %7 {
      %c0_55 = arith.constant 0 : index
      %c0_56 = arith.constant 0 : index
      %c0_57 = arith.constant 0 : index
      %121 = vector.load %arg2[%c0_55, %c0_56, %c0_57] : memref<1x16x128xbf16, #tpu.memory_space<vmem>>, vector<1x16x128xbf16>
      %122 = vector.shape_cast %121 : vector<1x16x128xbf16> to vector<16x128xbf16>
      %c0_58 = arith.constant 0 : index
      %c0_59 = arith.constant 0 : index
      %123 = vector.load %arg3[%c0_58, %c0_59] : memref<128x128xbf16, #tpu.memory_space<vmem>>, vector<128x128xbf16>
      %cst_60 = arith.constant dense<0.000000e+00> : vector<16x128xf32>
      %124 = tpu.matmul %122, %123, %cst_60 {dimension_numbers = #tpu.dot_dimension_numbers<[1], [0], [0], [1], [0, 0, 1, 1], [], []>} : vector<16x128xbf16>, vector<128x128xbf16>, vector<16x128xf32> -> vector<16x128xf32>
      %c0_61 = arith.constant 0 : index
      %c0_62 = arith.constant 0 : index
      %125 = vector.load %arg18[%c0_61, %c0_62] : memref<16x128xf32, #tpu.memory_space<vmem>>, vector<16x128xf32>
      tpu.vector_store %arg18[%c0_61, %c0_62], %124 {strides = array<i32>} : memref<16x128xf32, #tpu.memory_space<vmem>>, vector<16x128xf32>,
    } else {
    }
    %c0 = arith.constant 0 : index
    %c0_1 = arith.constant 0 : index
    %8 = vector.load %arg18[%c0, %c0_1] : memref<16x128xf32, #tpu.memory_space<vmem>>, vector<16x128xf32>
    %c0_2 = arith.constant 0 : index
    %c0_3 = arith.constant 0 : index
    %c0_4 = arith.constant 0 : index
    %9 = vector.load %arg4[%c0_2, %c0_3, %c0_4] : memref<1x2x128xf32, #tpu.memory_space<vmem>>, vector<1x2x128xf32>
    %10 = vector.shape_cast %9 : vector<1x2x128xf32> to vector<2x128xf32>
    %11 = vector.extract_strided_slice %10 {offsets = [0, 0], sizes = [1, 128], strides = [1, 1]} : vector<2x128xf32> to vector<1x128xf32>
    %12 = vector.extract_strided_slice %10 {offsets = [1, 0], sizes = [1, 128], strides = [1, 1]} : vector<2x128xf32> to vector<1x128xf32>
    %13 = vector.broadcast %4 : vector<1x128xf32> to vector<16x128xf32>
    %14 = arith.mulf %8, %13 : vector<16x128xf32>
    %cst = arith.constant dense<0.000000e+00> : vector<16xf32>
    %15 = vector.multi_reduction <add>, %14, %cst [1] : vector<16x128xf32> to vector<16xf32>
    %16 = vector.shape_cast %15 : vector<16xf32> to vector<16x1xf32>
    %cst_5 = arith.constant 3.125000e-02 : f32
    %17 = vector.broadcast %cst_5 : f32 to vector<16x1xf32>
    %18 = arith.mulf %16, %17 : vector<16x1xf32>
    %19 = vector.broadcast %18 : vector<16x1xf32> to vector<16x128xf32>
    %20 = arith.subf %8, %19 : vector<16x128xf32>
    %21 = vector.broadcast %4 : vector<1x128xf32> to vector<16x128xf32>
    %22 = arith.mulf %20, %21 : vector<16x128xf32>
    %23 = arith.mulf %22, %22 : vector<16x128xf32>
    %cst_6 = arith.constant dense<0.000000e+00> : vector<16xf32>
    %24 = vector.multi_reduction <add>, %23, %cst_6 [1] : vector<16x128xf32> to vector<16xf32>
    %25 = vector.shape_cast %24 : vector<16xf32> to vector<16x1xf32>
    %cst_7 = arith.constant 3.125000e-02 : f32
    %26 = vector.broadcast %cst_7 : f32 to vector<16x1xf32>
    %27 = arith.mulf %25, %26 : vector<16x1xf32>
    %cst_8 = arith.constant 9.99999997E-7 : f32
    %28 = vector.broadcast %cst_8 : f32 to vector<16x1xf32>
    %29 = arith.addf %27, %28 : vector<16x1xf32>
    %30 = math.rsqrt %29 : vector<16x1xf32>
    %31 = vector.broadcast %30 : vector<16x1xf32> to vector<16x128xf32>
    %32 = arith.mulf %22, %31 : vector<16x128xf32>
    %33 = vector.broadcast %11 : vector<1x128xf32> to vector<16x128xf32>
    %34 = arith.mulf %32, %33 : vector<16x128xf32>
    %35 = vector.broadcast %12 : vector<1x128xf32> to vector<16x128xf32>
    %36 = arith.addf %34, %35 : vector<16x128xf32>
    %37 = arith.truncf %36 : vector<16x128xf32> to vector<16x128xbf16>
    %c0_9 = arith.constant 0 : index
    %c0_10 = arith.constant 0 : index
    %c0_11 = arith.constant 0 : index
    %38 = vector.load %arg5[%c0_9, %c0_10, %c0_11] : memref<1x16x128xbf16, #tpu.memory_space<vmem>>, vector<1x16x128xbf16>
    %39 = vector.shape_cast %38 : vector<1x16x128xbf16> to vector<16x128xbf16>
    %cst_12 = arith.constant dense<0.000000e+00> : vector<128x128xf32>
    %40 = tpu.matmul %39, %37, %cst_12 {dimension_numbers = #tpu.dot_dimension_numbers<[0], [0], [1], [1], [0, 1, 1, 1], [], []>} : vector<16x128xbf16>, vector<16x128xbf16>, vector<128x128xf32> -> vector<128x128xf32>
    %c0_13 = arith.constant 0 : index
    %c0_14 = arith.constant 0 : index
    %c0_15 = arith.constant 0 : index
    %41 = vector.load %arg6[%c0_13, %c0_14, %c0_15] : memref<1x128x1xf32, #tpu.memory_space<vmem>>, vector<1x128x1xf32>
    %42 = vector.shape_cast %41 : vector<1x128x1xf32> to vector<128x1xf32>
    %43 = vector.broadcast %42 : vector<128x1xf32> to vector<128x128xf32>
    %44 = arith.addf %40, %43 : vector<128x128xf32>
    %cst_16 = arith.constant 5.000000e-01 : f32
    %45 = vector.broadcast %cst_16 : f32 to vector<128x128xf32>
    %46 = arith.mulf %45, %44 : vector<128x128xf32>
    %cst_17 = arith.constant 0.707106769 : f32
    %47 = vector.broadcast %cst_17 : f32 to vector<128x128xf32>
    %48 = arith.mulf %44, %47 : vector<128x128xf32>
    %49 = math.erf %48 : vector<128x128xf32>
    %cst_18 = arith.constant 1.000000e+00 : f32
    %50 = vector.broadcast %cst_18 : f32 to vector<128x128xf32>
    %51 = arith.addf %50, %49 : vector<128x128xf32>
    %52 = arith.mulf %46, %51 : vector<128x128xf32>
    %53 = arith.truncf %52 : vector<128x128xf32> to vector<128x128xbf16>
    %c0_19 = arith.constant 0 : index
    %c0_20 = arith.constant 0 : index
    %c0_21 = arith.constant 0 : index
    %54 = vector.load %arg7[%c0_19, %c0_20, %c0_21] : memref<1x128x16xbf16, #tpu.memory_space<vmem>>, vector<1x128x16xbf16>
    %55 = vector.shape_cast %54 : vector<1x128x16xbf16> to vector<128x16xbf16>
    %cst_22 = arith.constant dense<0.000000e+00> : vector<16x128xf32>
    %56 = tpu.matmul %55, %53, %cst_22 {dimension_numbers = #tpu.dot_dimension_numbers<[0], [0], [1], [1], [0, 1, 1, 1], [], []>} : vector<128x16xbf16>, vector<128x128xbf16>, vector<16x128xf32> -> vector<16x128xf32>
    %c0_23 = arith.constant 0 : index
    %c0_24 = arith.constant 0 : index
    %c0_25 = arith.constant 0 : index
    %57 = vector.load %arg8[%c0_23, %c0_24, %c0_25] : memref<1x16x1xf32, #tpu.memory_space<vmem>>, vector<1x16x1xf32>
    %58 = vector.shape_cast %57 : vector<1x16x1xf32> to vector<16x1xf32>
    %59 = vector.broadcast %58 : vector<16x1xf32> to vector<16x128xf32>
    %60 = arith.addf %56, %59 : vector<16x128xf32>
    %61 = vector.broadcast %4 : vector<1x128xf32> to vector<16x128xf32>
    %62 = arith.mulf %60, %61 : vector<16x128xf32>
    %63 = arith.addf %8, %62 : vector<16x128xf32>
    %c0_26 = arith.constant 0 : index
    %c0_27 = arith.constant 0 : index
    %c0_28 = arith.constant 0 : index
    %64 = vector.load %arg9[%c0_26, %c0_27, %c0_28] : memref<1x2x128xf32, #tpu.memory_space<vmem>>, vector<1x2x128xf32>
    %65 = vector.shape_cast %64 : vector<1x2x128xf32> to vector<2x128xf32>
    %66 = vector.extract_strided_slice %65 {offsets = [0, 0], sizes = [1, 128], strides = [1, 1]} : vector<2x128xf32> to vector<1x128xf32>
    %67 = vector.extract_strided_slice %65 {offsets = [1, 0], sizes = [1, 128], strides = [1, 1]} : vector<2x128xf32> to vector<1x128xf32>
    %68 = vector.broadcast %4 : vector<1x128xf32> to vector<16x128xf32>
    %69 = arith.mulf %63, %68 : vector<16x128xf32>
    %cst_29 = arith.constant dense<0.000000e+00> : vector<16xf32>
    %70 = vector.multi_reduction <add>, %69, %cst_29 [1] : vector<16x128xf32> to vector<16xf32>
    %71 = vector.shape_cast %70 : vector<16xf32> to vector<16x1xf32>
    %cst_30 = arith.constant 3.125000e-02 : f32
    %72 = vector.broadcast %cst_30 : f32 to vector<16x1xf32>
    %73 = arith.mulf %71, %72 : vector<16x1xf32>
    %74 = vector.broadcast %73 : vector<16x1xf32> to vector<16x128xf32>
    %75 = arith.subf %63, %74 : vector<16x128xf32>
    %76 = vector.broadcast %4 : vector<1x128xf32> to vector<16x128xf32>
    %77 = arith.mulf %75, %76 : vector<16x128xf32>
    %78 = arith.mulf %77, %77 : vector<16x128xf32>
    %cst_31 = arith.constant dense<0.000000e+00> : vector<16xf32>
    %79 = vector.multi_reduction <add>, %78, %cst_31 [1] : vector<16x128xf32> to vector<16xf32>
    %80 = vector.shape_cast %79 : vector<16xf32> to vector<16x1xf32>
    %cst_32 = arith.constant 3.125000e-02 : f32
    %81 = vector.broadcast %cst_32 : f32 to vector<16x1xf32>
    %82 = arith.mulf %80, %81 : vector<16x1xf32>
    %cst_33 = arith.constant 9.99999997E-7 : f32
    %83 = vector.broadcast %cst_33 : f32 to vector<16x1xf32>
    %84 = arith.addf %82, %83 : vector<16x1xf32>
    %85 = math.rsqrt %84 : vector<16x1xf32>
    %86 = vector.broadcast %85 : vector<16x1xf32> to vector<16x128xf32>
    %87 = arith.mulf %77, %86 : vector<16x128xf32>
    %88 = vector.broadcast %66 : vector<1x128xf32> to vector<16x128xf32>
    %89 = arith.mulf %87, %88 : vector<16x128xf32>
    %90 = vector.broadcast %67 : vector<1x128xf32> to vector<16x128xf32>
    %91 = arith.addf %89, %90 : vector<16x128xf32>
    %92 = arith.truncf %91 : vector<16x128xf32> to vector<16x128xbf16>
    %c0_34 = arith.constant 0 : index
    %c0_35 = arith.constant 0 : index
    %c0_36 = arith.constant 0 : index
    %93 = vector.load %arg10[%c0_34, %c0_35, %c0_36] : memref<1x128x128xbf16, #tpu.memory_space<vmem>>, vector<1x128x128xbf16>
    %94 = vector.shape_cast %93 : vector<1x128x128xbf16> to vector<128x128xbf16>
    %cst_37 = arith.constant dense<0.000000e+00> : vector<16x128xf32>
    %95 = tpu.matmul %92, %94, %cst_37 {dimension_numbers = #tpu.dot_dimension_numbers<[1], [0], [0], [1], [0, 0, 1, 1], [], []>} : vector<16x128xbf16>, vector<128x128xbf16>, vector<16x128xf32> -> vector<16x128xf32>
    %c0_38 = arith.constant 0 : index
    %c0_39 = arith.constant 0 : index
    %c0_40 = arith.constant 0 : index
    %96 = vector.load %arg11[%c0_38, %c0_39, %c0_40] : memref<1x1x128xf32, #tpu.memory_space<vmem>>, vector<1x1x128xf32>
    %97 = vector.shape_cast %96 : vector<1x1x128xf32> to vector<1x128xf32>
    %98 = vector.broadcast %97 : vector<1x128xf32> to vector<16x128xf32>
    %99 = arith.addf %95, %98 : vector<16x128xf32>
    %cst_41 = arith.constant 5.000000e-01 : f32
    %100 = vector.broadcast %cst_41 : f32 to vector<16x128xf32>
    %101 = arith.mulf %100, %99 : vector<16x128xf32>
    %cst_42 = arith.constant 0.707106769 : f32
    %102 = vector.broadcast %cst_42 : f32 to vector<16x128xf32>
    %103 = arith.mulf %99, %102 : vector<16x128xf32>
    %104 = math.erf %103 : vector<16x128xf32>
    %cst_43 = arith.constant 1.000000e+00 : f32
    %105 = vector.broadcast %cst_43 : f32 to vector<16x128xf32>
    %106 = arith.addf %105, %104 : vector<16x128xf32>
    %107 = arith.mulf %101, %106 : vector<16x128xf32>
    %108 = arith.truncf %107 : vector<16x128xf32> to vector<16x128xbf16>
    %c0_44 = arith.constant 0 : index
    %c0_45 = arith.constant 0 : index
    %c0_46 = arith.constant 0 : index
    %109 = vector.load %arg12[%c0_44, %c0_45, %c0_46] : memref<1x128x128xbf16, #tpu.memory_space<vmem>>, vector<1x128x128xbf16>
    %110 = vector.shape_cast %109 : vector<1x128x128xbf16> to vector<128x128xbf16>
    %cst_47 = arith.constant dense<0.000000e+00> : vector<16x128xf32>
    %111 = tpu.matmul %108, %110, %cst_47 {dimension_numbers = #tpu.dot_dimension_numbers<[1], [0], [0], [1], [0, 0, 1, 1], [], []>} : vector<16x128xbf16>, vector<128x128xbf16>, vector<16x128xf32> -> vector<16x128xf32>
    %112 = arith.addf %63, %111 : vector<16x128xf32>
    %c0_48 = arith.constant 0 : index
    %c0_49 = arith.constant 0 : index
    %c0_50 = arith.constant 0 : index
    %113 = vector.load %arg13[%c0_48, %c0_49, %c0_50] : memref<1x1x128xf32, #tpu.memory_space<vmem>>, vector<1x1x128xf32>
    %114 = vector.shape_cast %113 : vector<1x1x128xf32> to vector<1x128xf32>
    %115 = vector.broadcast %114 : vector<1x128xf32> to vector<16x128xf32>
    %116 = arith.addf %112, %115 : vector<16x128xf32>
    %c0_51 = arith.constant 0 : index
    %c0_52 = arith.constant 0 : index
    %117 = vector.load %arg18[%c0_51, %c0_52] : memref<16x128xf32, #tpu.memory_space<vmem>>, vector<16x128xf32>
    tpu.vector_store %arg18[%c0_51, %c0_52], %116 {strides = array<i32>} : memref<16x128xf32, #tpu.memory_space<vmem>>, vector<16x128xf32>,
    %c1_i32 = arith.constant 1 : i32
    %118 = arith.cmpi eq, %arg1, %c1_i32 : i32
    %119 = arith.extui %118 : i1 to i32
    %cst_53 = arith.constant 3.125000e-02 : f32
    %c0_i32_54 = arith.constant 0 : i32
    %120 = arith.cmpi ne, %119, %c0_i32_54 : i32
    scf.if %120 {
      %c0_55 = arith.constant 0 : index
      %c0_56 = arith.constant 0 : index
      %121 = vector.load %arg14[%c0_55, %c0_56] : memref<2x128xf32, #tpu.memory_space<vmem>>, vector<2x128xf32>
      %122 = vector.extract_strided_slice %121 {offsets = [0, 0], sizes = [1, 128], strides = [1, 1]} : vector<2x128xf32> to vector<1x128xf32>
      %123 = vector.extract_strided_slice %121 {offsets = [1, 0], sizes = [1, 128], strides = [1, 1]} : vector<2x128xf32> to vector<1x128xf32>
      %124 = vector.broadcast %4 : vector<1x128xf32> to vector<16x128xf32>
      %125 = arith.mulf %116, %124 : vector<16x128xf32>
      %cst_57 = arith.constant dense<0.000000e+00> : vector<16xf32>
      %126 = vector.multi_reduction <add>, %125, %cst_57 [1] : vector<16x128xf32> to vector<16xf32>
      %127 = vector.shape_cast %126 : vector<16xf32> to vector<16x1xf32>
      %128 = vector.broadcast %cst_53 : f32 to vector<16x1xf32>
      %129 = arith.mulf %127, %128 : vector<16x1xf32>
      %130 = vector.broadcast %129 : vector<16x1xf32> to vector<16x128xf32>
      %131 = arith.subf %116, %130 : vector<16x128xf32>
      %132 = vector.broadcast %4 : vector<1x128xf32> to vector<16x128xf32>
      %133 = arith.mulf %131, %132 : vector<16x128xf32>
      %134 = arith.mulf %133, %133 : vector<16x128xf32>
      %cst_58 = arith.constant dense<0.000000e+00> : vector<16xf32>
      %135 = vector.multi_reduction <add>, %134, %cst_58 [1] : vector<16x128xf32> to vector<16xf32>
      %136 = vector.shape_cast %135 : vector<16xf32> to vector<16x1xf32>
      %137 = vector.broadcast %cst_53 : f32 to vector<16x1xf32>
      %138 = arith.mulf %136, %137 : vector<16x1xf32>
      %cst_59 = arith.constant 9.99999997E-7 : f32
      %139 = vector.broadcast %cst_59 : f32 to vector<16x1xf32>
      %140 = arith.addf %138, %139 : vector<16x1xf32>
      %141 = math.rsqrt %140 : vector<16x1xf32>
      %142 = vector.broadcast %141 : vector<16x1xf32> to vector<16x128xf32>
      %143 = arith.mulf %133, %142 : vector<16x128xf32>
      %144 = vector.broadcast %122 : vector<1x128xf32> to vector<16x128xf32>
      %145 = arith.mulf %143, %144 : vector<16x128xf32>
      %146 = vector.broadcast %123 : vector<1x128xf32> to vector<16x128xf32>
      %147 = arith.addf %145, %146 : vector<16x128xf32>
      %cst_60 = arith.constant dense<0.000000e+00> : vector<128xf32>
      %148 = vector.multi_reduction <add>, %147, %cst_60 [0] : vector<16x128xf32> to vector<128xf32>
      %149 = vector.shape_cast %148 : vector<128xf32> to vector<1x128xf32>
      %cst_61 = arith.constant 1.600000e+01 : f32
      %150 = vector.broadcast %cst_61 : f32 to vector<1x128xf32>
      %151 = arith.divf %149, %150 : vector<1x128xf32>
      %152 = arith.truncf %151 : vector<1x128xf32> to vector<1x128xbf16>
      %c0_62 = arith.constant 0 : index
      %c0_63 = arith.constant 0 : index
      %153 = vector.load %arg15[%c0_62, %c0_63] : memref<128x128xbf16, #tpu.memory_space<vmem>>, vector<128x128xbf16>
      %cst_64 = arith.constant dense<0.000000e+00> : vector<1x128xf32>
      %154 = tpu.matmul %152, %153, %cst_64 {dimension_numbers = #tpu.dot_dimension_numbers<[1], [0], [0], [1], [0, 0, 1, 1], [], []>} : vector<1x128xbf16>, vector<128x128xbf16>, vector<1x128xf32> -> vector<1x128xf32>
      %c0_65 = arith.constant 0 : index
      %c0_66 = arith.constant 0 : index
      %155 = vector.load %arg16[%c0_65, %c0_66] : memref<1x128xf32, #tpu.memory_space<vmem>>, vector<1x128xf32>
      %156 = arith.addf %154, %155 : vector<1x128xf32>
      %c0_67 = arith.constant 0 : index
      %c0_68 = arith.constant 0 : index
      %c0_69 = arith.constant 0 : index
      %157 = vector.load %arg17[%c0_67, %c0_68, %c0_69] : memref<1x1x128xf32, #tpu.memory_space<vmem>>, vector<1x1x128xf32>
      %158 = vector.shape_cast %157 : vector<1x1x128xf32> to vector<1x128xf32>
      %159 = vector.shape_cast %156 : vector<1x128xf32> to vector<1x1x128xf32>
      tpu.vector_store %arg17[%c0_67, %c0_68, %c0_69], %159 {strides = array<i32>} : memref<1x1x128xf32, #tpu.memory_space<vmem>>, vector<1x1x128xf32>,
    } else {
    }
    return
  }
  func.func @transform_0(%arg0: i32, %arg1: i32) -> (i32, i32, i32) {
    %c0_i32 = arith.constant 0 : i32
    %c0_i32_0 = arith.constant 0 : i32
    %c0_i32_1 = arith.constant 0 : i32
    return %arg0, %c0_i32, %c0_i32_0 : i32, i32, i32
  }
  func.func @transform_1(%arg0: i32, %arg1: i32) -> (i32, i32) {
    %c0_i32 = arith.constant 0 : i32
    %c0_i32_0 = arith.constant 0 : i32
    %c0_i32_1 = arith.constant 0 : i32
    return %c0_i32, %c0_i32_0 : i32, i32
  }
  func.func @transform_2(%arg0: i32, %arg1: i32) -> (i32, i32, i32) {
    %c0_i32 = arith.constant 0 : i32
    %c0_i32_0 = arith.constant 0 : i32
    %c0_i32_1 = arith.constant 0 : i32
    return %arg1, %c0_i32, %c0_i32_0 : i32, i32, i32
  }
  func.func @transform_3(%arg0: i32, %arg1: i32) -> (i32, i32, i32) {
    %c0_i32 = arith.constant 0 : i32
    %c0_i32_0 = arith.constant 0 : i32
    %c0_i32_1 = arith.constant 0 : i32
    return %arg1, %c0_i32, %c0_i32_0 : i32, i32, i32
  }
  func.func @transform_4(%arg0: i32, %arg1: i32) -> (i32, i32, i32) {
    %c0_i32 = arith.constant 0 : i32
    %c0_i32_0 = arith.constant 0 : i32
    %c0_i32_1 = arith.constant 0 : i32
    return %arg1, %c0_i32, %c0_i32_0 : i32, i32, i32
  }
  func.func @transform_5(%arg0: i32, %arg1: i32) -> (i32, i32, i32) {
    %c0_i32 = arith.constant 0 : i32
    %c0_i32_0 = arith.constant 0 : i32
    %c0_i32_1 = arith.constant 0 : i32
    return %arg1, %c0_i32, %c0_i32_0 : i32, i32, i32
  }
  func.func @transform_6(%arg0: i32, %arg1: i32) -> (i32, i32, i32) {
    %c0_i32 = arith.constant 0 : i32
    %c0_i32_0 = arith.constant 0 : i32
    %c0_i32_1 = arith.constant 0 : i32
    return %arg1, %c0_i32, %c0_i32_0 : i32, i32, i32
  }
  func.func @transform_7(%arg0: i32, %arg1: i32) -> (i32, i32, i32) {
    %c0_i32 = arith.constant 0 : i32
    %c0_i32_0 = arith.constant 0 : i32
    %c0_i32_1 = arith.constant 0 : i32
    return %arg1, %c0_i32, %c0_i32_0 : i32, i32, i32
  }
  func.func @transform_8(%arg0: i32, %arg1: i32) -> (i32, i32, i32) {
    %c0_i32 = arith.constant 0 : i32
    %c0_i32_0 = arith.constant 0 : i32
    %c0_i32_1 = arith.constant 0 : i32
    return %arg1, %c0_i32, %c0_i32_0 : i32, i32, i32
  }
  func.func @transform_9(%arg0: i32, %arg1: i32) -> (i32, i32, i32) {
    %c0_i32 = arith.constant 0 : i32
    %c0_i32_0 = arith.constant 0 : i32
    %c0_i32_1 = arith.constant 0 : i32
    return %arg1, %c0_i32, %c0_i32_0 : i32, i32, i32
  }
  func.func @transform_10(%arg0: i32, %arg1: i32) -> (i32, i32, i32) {
    %c0_i32 = arith.constant 0 : i32
    %c0_i32_0 = arith.constant 0 : i32
    %c0_i32_1 = arith.constant 0 : i32
    return %arg1, %c0_i32, %c0_i32_0 : i32, i32, i32
  }
  func.func @transform_11(%arg0: i32, %arg1: i32) -> (i32, i32, i32) {
    %c0_i32 = arith.constant 0 : i32
    %c0_i32_0 = arith.constant 0 : i32
    %c0_i32_1 = arith.constant 0 : i32
    return %arg1, %c0_i32, %c0_i32_0 : i32, i32, i32
  }
  func.func @transform_12(%arg0: i32, %arg1: i32) -> (i32, i32) {
    %c0_i32 = arith.constant 0 : i32
    %c0_i32_0 = arith.constant 0 : i32
    %c0_i32_1 = arith.constant 0 : i32
    return %c0_i32, %c0_i32_0 : i32, i32
  }
  func.func @transform_13(%arg0: i32, %arg1: i32) -> (i32, i32) {
    %c0_i32 = arith.constant 0 : i32
    %c0_i32_0 = arith.constant 0 : i32
    %c0_i32_1 = arith.constant 0 : i32
    return %c0_i32, %c0_i32_0 : i32, i32
  }
  func.func @transform_14(%arg0: i32, %arg1: i32) -> (i32, i32) {
    %c0_i32 = arith.constant 0 : i32
    %c0_i32_0 = arith.constant 0 : i32
    %c0_i32_1 = arith.constant 0 : i32
    return %c0_i32, %c0_i32_0 : i32, i32
  }
  func.func @transform_15(%arg0: i32, %arg1: i32) -> (i32, i32, i32) {
    %c0_i32 = arith.constant 0 : i32
    %c0_i32_0 = arith.constant 0 : i32
    %c0_i32_1 = arith.constant 0 : i32
    return %arg0, %c0_i32, %c0_i32_0 : i32, i32, i32
  }
}

</mosaic_0001>

<llo_original>
// kernel: tpu_custom_call.1
$region0: #{tpu_custom_call.1}
  #allocation0 [shape = 'u32[]', space=smem, size = 0x4, offset = 0x4, fixed_abs, tag = 'smem constant byte address 0x4 - core index']
  #allocation1 [shape = 'u32[144,128]{1,0:T(1,128)}', space=vmem, size = 0x12000, scoped, tag = 'internal scratch']
  #allocation2 [shape = 'f32[16,128]{1,0:T(8,128)}', space=vmem, size = 0x2000, scoped, tag = 'scratch operand']
  %s0 = inlined_call_operand.vmem [shape: bf16[2,16,128], index: 0, kind: input, shape index: {}]
  %s1 = inlined_call_operand.vmem [shape: bf16[128,128], index: 1, kind: input, shape index: {}]
  %s2 = inlined_call_operand.vmem [shape: f32[2,2,128], index: 2, kind: input, shape index: {}]
  %s3 = inlined_call_operand.vmem [shape: bf16[2,16,128], index: 3, kind: input, shape index: {}]
  %s4 = inlined_call_operand.vmem [shape: f32[2,128,1], index: 4, kind: input, shape index: {}]
  %s5 = inlined_call_operand.vmem [shape: bf16[2,128,16], index: 5, kind: input, shape index: {}]
  %s6 = inlined_call_operand.vmem [shape: f32[2,16,1], index: 6, kind: input, shape index: {}]
  %s7 = inlined_call_operand.vmem [shape: f32[2,2,128], index: 7, kind: input, shape index: {}]
  %s8 = inlined_call_operand.vmem [shape: bf16[2,128,128], index: 8, kind: input, shape index: {}]
  %s9 = inlined_call_operand.vmem [shape: f32[2,1,128], index: 9, kind: input, shape index: {}]
  %s10 = inlined_call_operand.vmem [shape: bf16[2,128,128], index: 10, kind: input, shape index: {}]
  %s11 = inlined_call_operand.vmem [shape: f32[2,1,128], index: 11, kind: input, shape index: {}]
  %s12 = inlined_call_operand.vmem [shape: f32[2,128], index: 12, kind: input, shape index: {}]
  %s13 = inlined_call_operand.vmem [shape: bf16[128,128], index: 13, kind: input, shape index: {}]
  %s14 = inlined_call_operand.vmem [shape: f32[1,128], index: 14, kind: input, shape index: {}]
  %s15 = inlined_call_operand.hbm [shape: f32[2,1,128], index: 15, kind: output, shape index: {}]
  %s16 = sld [smem:[#allocation0]]
  $region101: #{tpu_custom_call.1} parent=0
    _
  %s18 = ssub.s32 1, %s16
  %s19 = scalar_select 0, %s18, %s16
  $region1: #{tpu_custom_call.1} parent=0
    #allocation3 [shape = 'u8[1024]{0}', space=vmem, size = 0x400, scoped, tag = 'output window, operand 0']
    #allocation4 [shape = 's32[2]{0}', space=sflag, size = 0x8, scoped, tag = 'scoped memory for tpu_custom_call.1']
    %20 = vsyncpa [#allocation4], 0
    %s21 = scalar_lea.sflag [#allocation4], 1
    %22 = vsyncpa %s21, 0
    loop: start=0, step=1, limit=6
    $region2: #{tpu_custom_call.1} parent=1 // loop_pre_header
      _
    $region3: #{tpu_custom_call.1} parent=1 // loop_header
      %s24 = sphi 0, %s28
      %p25 = scmp.ge.s32.totalorder %s24, 6
      %s31 = sphi 0, %s43
      %s32 = sphi 0, %s39
      %s33 = sphi 0, %s31
      %s34 = sphi 0, %s32
      %s35 = sphi 0, %s33
      %s36 = sphi 0, %s34
      %s46 = sphi 0, %s48
      %s49 = sphi 0, %s46
      %s50 = sphi 0, %s49
      %s66 = sphi 0, %s50
      %s70 = sphi 0, %s70
      %s72 = sphi 0, %s70
      %s73 = sphi 0, %s72
      %s87 = sphi 0, %s73
      %s93 = sphi 0, %s95
      %s96 = sphi 0, %s93
      %s97 = sphi 0, %s96
      %s113 = sphi 0, %s97
      %s119 = sphi 0, %s121
      %s122 = sphi 0, %s119
      %s123 = sphi 0, %s122
      %s139 = sphi 0, %s123
      %s145 = sphi 0, %s147
      %s148 = sphi 0, %s145
      %s149 = sphi 0, %s148
      %s165 = sphi 0, %s149
      %s171 = sphi 0, %s173
      %s174 = sphi 0, %s171
      %s175 = sphi 0, %s174
      %s191 = sphi 0, %s175
      %s197 = sphi 0, %s199
      %s200 = sphi 0, %s197
      %s201 = sphi 0, %s200
      %s217 = sphi 0, %s201
      %s223 = sphi 0, %s225
      %s226 = sphi 0, %s223
      %s227 = sphi 0, %s226
      %s243 = sphi 0, %s227
      %s249 = sphi 0, %s251
      %s252 = sphi 0, %s249
      %s253 = sphi 0, %s252
      %s269 = sphi 0, %s253
      %s275 = sphi 0, %s277
      %s278 = sphi 0, %s275
      %s279 = sphi 0, %s278
      %s295 = sphi 0, %s279
      %s301 = sphi 0, %s303
      %s304 = sphi 0, %s301
      %s305 = sphi 0, %s304
      %s321 = sphi 0, %s305
      %s327 = sphi 0, %s329
      %s330 = sphi 0, %s327
      %s331 = sphi 0, %s330
      %s347 = sphi 0, %s331
      %s351 = sphi 0, %s351
      %s353 = sphi 0, %s351
      %s354 = sphi 0, %s353
      %s368 = sphi 0, %s354
      %s372 = sphi 0, %s372
      %s374 = sphi 0, %s372
      %s375 = sphi 0, %s374
      %s389 = sphi 0, %s375
      %s393 = sphi 0, %s393
      %s395 = sphi 0, %s393
      %s396 = sphi 0, %s395
      %s410 = sphi 0, %s396
      %s416 = sphi 0, %s418
      %s419 = sphi 0, %s416
      %s420 = sphi 0, %s419
      %s436 = sphi 0, %s420
    $region4: #{tpu_custom_call.1} parent=1 // loop_header_branch
      %27 = sbr.rel (%p25) target = $region8
    $region5: #{tpu_custom_call.1} parent=1 // loop_body
      %s29 = ssub.s32 %s24, 1
      %s30 = ssub.s32 %s24, 2
      %s37 = sadd.s32 1, %s32
      %p38 = scmp.ge.s32.totalorder %s37, 2
      %s39 = scalar_select %p38, 0, %s37
      %s40 = sadd.s32 1, %s31
      %s41 = scalar_select %p38, %s40, %s31
      %p42 = scmp.ge.s32.totalorder %s41, 2
      %s43 = scalar_select %p42, 0, %s41
      %s44 = ssub.s32 %s31, %s43
      %p45 = scmp.eq.s32.totalorder %s44, 0
      %s47 = sadd.s32 %s46, 1
      %s48 = scalar_select %p45, %s46, %s47
      %p51 = pneg %p45
      %p52 = scmp.eq.s32.totalorder %s24, 3
      %p53 = por %p51, %p52
      %p54 = scmp.ne.s32.totalorder %s46, %s49
      %p55 = scmp.eq.s32.totalorder %s24, 0
      %p56 = por %p54, %p55
      %p57 = scmp.ne.s32.totalorder %s46, %s49
      %p58 = scmp.eq.s32.totalorder %s29, 3
      %p59 = por %p57, %p58
      %p60 = scmp.ne.s32.totalorder %s49, %s50
      %p61 = scmp.eq.s32.totalorder %s29, 0
      %p62 = por %p60, %p61
      %p63 = scmp.ne.s32.totalorder %s49, %s50
      %p64 = scmp.eq.s32.totalorder %s30, 3
      %p65 = por %p63, %p64
      %p67 = scmp.ne.s32.totalorder %s50, %s66
      %p68 = scmp.eq.s32.totalorder %s30, 0
      %p69 = por %p67, %p68
      %s71 = sadd.s32 %s70, 1
      %p74 = scmp.eq.s32.totalorder %s24, 3
      %p75 = scmp.ne.s32.totalorder %s70, %s72
      %p76 = scmp.eq.s32.totalorder %s24, 0
      %p77 = por %p75, %p76
      %p78 = scmp.ne.s32.totalorder %s70, %s72
      %p79 = scmp.eq.s32.totalorder %s29, 3
      %p80 = por %p78, %p79
      %p81 = scmp.ne.s32.totalorder %s72, %s73
      %p82 = scmp.eq.s32.totalorder %s29, 0
      %p83 = por %p81, %p82
      %p84 = scmp.ne.s32.totalorder %s72, %s73
      %p85 = scmp.eq.s32.totalorder %s30, 3
      %p86 = por %p84, %p85
      %p88 = scmp.ne.s32.totalorder %s73, %s87
      %p89 = scmp.eq.s32.totalorder %s30, 0
      %p90 = por %p88, %p89
      %s91 = ssub.s32 %s32, %s39
      %p92 = scmp.eq.s32.totalorder %s91, 0
      %s94 = sadd.s32 %s93, 1
      %s95 = scalar_select %p92, %s93, %s94
      %p98 = pneg %p92
      %p99 = scmp.eq.s32.totalorder %s24, 3
      %p100 = por %p98, %p99
      %p101 = scmp.ne.s32.totalorder %s93, %s96
      %p102 = scmp.eq.s32.totalorder %s24, 0
      %p103 = por %p101, %p102
      %p104 = scmp.ne.s32.totalorder %s93, %s96
      %p105 = scmp.eq.s32.totalorder %s29, 3
      %p106 = por %p104, %p105
      %p107 = scmp.ne.s32.totalorder %s96, %s97
      %p108 = scmp.eq.s32.totalorder %s29, 0
      %p109 = por %p107, %p108
      %p110 = scmp.ne.s32.totalorder %s96, %s97
      %p111 = scmp.eq.s32.totalorder %s30, 3
      %p112 = por %p110, %p111
      %p114 = scmp.ne.s32.totalorder %s97, %s113
      %p115 = scmp.eq.s32.totalorder %s30, 0
      %p116 = por %p114, %p115
      %s117 = ssub.s32 %s32, %s39
      %p118 = scmp.eq.s32.totalorder %s117, 0
      %s120 = sadd.s32 %s119, 1
      %s121 = scalar_select %p118, %s119, %s120
      %p124 = pneg %p118
      %p125 = scmp.eq.s32.totalorder %s24, 3
      %p126 = por %p124, %p125
      %p127 = scmp.ne.s32.totalorder %s119, %s122
      %p128 = scmp.eq.s32.totalorder %s24, 0
      %p129 = por %p127, %p128
      %p130 = scmp.ne.s32.totalorder %s119, %s122
      %p131 = scmp.eq.s32.totalorder %s29, 3
      %p132 = por %p130, %p131
      %p133 = scmp.ne.s32.totalorder %s122, %s123
      %p134 = scmp.eq.s32.totalorder %s29, 0
      %p135 = por %p133, %p134
      %p136 = scmp.ne.s32.totalorder %s122, %s123
      %p137 = scmp.eq.s32.totalorder %s30, 3
      %p138 = por %p136, %p137
      %p140 = scmp.ne.s32.totalorder %s123, %s139
      %p141 = scmp.eq.s32.totalorder %s30, 0
      %p142 = por %p140, %p141
      %s143 = ssub.s32 %s32, %s39
      %p144 = scmp.eq.s32.totalorder %s143, 0
      %s146 = sadd.s32 %s145, 1
      %s147 = scalar_select %p144, %s145, %s146
      %p150 = pneg %p144
      %p151 = scmp.eq.s32.totalorder %s24, 3
      %p152 = por %p150, %p151
      %p153 = scmp.ne.s32.totalorder %s145, %s148
      %p154 = scmp.eq.s32.totalorder %s24, 0
      %p155 = por %p153, %p154
      %p156 = scmp.ne.s32.totalorder %s145, %s148
      %p157 = scmp.eq.s32.totalorder %s29, 3
      %p158 = por %p156, %p157
      %p159 = scmp.ne.s32.totalorder %s148, %s149
      %p160 = scmp.eq.s32.totalorder %s29, 0
      %p161 = por %p159, %p160
      %p162 = scmp.ne.s32.totalorder %s148, %s149
      %p163 = scmp.eq.s32.totalorder %s30, 3
      %p164 = por %p162, %p163
      %p166 = scmp.ne.s32.totalorder %s149, %s165
      %p167 = scmp.eq.s32.totalorder %s30, 0
      %p168 = por %p166, %p167
      %s169 = ssub.s32 %s32, %s39
      %p170 = scmp.eq.s32.totalorder %s169, 0
      %s172 = sadd.s32 %s171, 1
      %s173 = scalar_select %p170, %s171, %s172
      %p176 = pneg %p170
      %p177 = scmp.eq.s32.totalorder %s24, 3
      %p178 = por %p176, %p177
      %p179 = scmp.ne.s32.totalorder %s171, %s174
      %p180 = scmp.eq.s32.totalorder %s24, 0
      %p181 = por %p179, %p180
      %p182 = scmp.ne.s32.totalorder %s171, %s174
      %p183 = scmp.eq.s32.totalorder %s29, 3
      %p184 = por %p182, %p183
      %p185 = scmp.ne.s32.totalorder %s174, %s175
      %p186 = scmp.eq.s32.totalorder %s29, 0
      %p187 = por %p185, %p186
      %p188 = scmp.ne.s32.totalorder %s174, %s175
      %p189 = scmp.eq.s32.totalorder %s30, 3
      %p190 = por %p188, %p189
      %p192 = scmp.ne.s32.totalorder %s175, %s191
      %p193 = scmp.eq.s32.totalorder %s30, 0
      %p194 = por %p192, %p193
      %s195 = ssub.s32 %s32, %s39
      %p196 = scmp.eq.s32.totalorder %s195, 0
      %s198 = sadd.s32 %s197, 1
      %s199 = scalar_select %p196, %s197, %s198
      %p202 = pneg %p196
      %p203 = scmp.eq.s32.totalorder %s24, 3
      %p204 = por %p202, %p203
      %p205 = scmp.ne.s32.totalorder %s197, %s200
      %p206 = scmp.eq.s32.totalorder %s24, 0
      %p207 = por %p205, %p206
      %p208 = scmp.ne.s32.totalorder %s197, %s200
      %p209 = scmp.eq.s32.totalorder %s29, 3
      %p210 = por %p208, %p209
      %p211 = scmp.ne.s32.totalorder %s200, %s201
      %p212 = scmp.eq.s32.totalorder %s29, 0
      %p213 = por %p211, %p212
      %p214 = scmp.ne.s32.totalorder %s200, %s201
      %p215 = scmp.eq.s32.totalorder %s30, 3
      %p216 = por %p214, %p215
      %p218 = scmp.ne.s32.totalorder %s201, %s217
      %p219 = scmp.eq.s32.totalorder %s30, 0
      %p220 = por %p218, %p219
      %s221 = ssub.s32 %s32, %s39
      %p222 = scmp.eq.s32.totalorder %s221, 0
      %s224 = sadd.s32 %s223, 1
      %s225 = scalar_select %p222, %s223, %s224
      %p228 = pneg %p222
      %p229 = scmp.eq.s32.totalorder %s24, 3
      %p230 = por %p228, %p229
      %p231 = scmp.ne.s32.totalorder %s223, %s226
      %p232 = scmp.eq.s32.totalorder %s24, 0
      %p233 = por %p231, %p232
      %p234 = scmp.ne.s32.totalorder %s223, %s226
      %p235 = scmp.eq.s32.totalorder %s29, 3
      %p236 = por %p234, %p235
      %p237 = scmp.ne.s32.totalorder %s226, %s227
      %p238 = scmp.eq.s32.totalorder %s29, 0
      %p239 = por %p237, %p238
      %p240 = scmp.ne.s32.totalorder %s226, %s227
      %p241 = scmp.eq.s32.totalorder %s30, 3
      %p242 = por %p240, %p241
      %p244 = scmp.ne.s32.totalorder %s227, %s243
      %p245 = scmp.eq.s32.totalorder %s30, 0
      %p246 = por %p244, %p245
      %s247 = ssub.s32 %s32, %s39
      %p248 = scmp.eq.s32.totalorder %s247, 0
      %s250 = sadd.s32 %s249, 1
      %s251 = scalar_select %p248, %s249, %s250
      %p254 = pneg %p248
      %p255 = scmp.eq.s32.totalorder %s24, 3
      %p256 = por %p254, %p255
      %p257 = scmp.ne.s32.totalorder %s249, %s252
      %p258 = scmp.eq.s32.totalorder %s24, 0
      %p259 = por %p257, %p258
      %p260 = scmp.ne.s32.totalorder %s249, %s252
      %p261 = scmp.eq.s32.totalorder %s29, 3
      %p262 = por %p260, %p261
      %p263 = scmp.ne.s32.totalorder %s252, %s253
      %p264 = scmp.eq.s32.totalorder %s29, 0
      %p265 = por %p263, %p264
      %p266 = scmp.ne.s32.totalorder %s252, %s253
      %p267 = scmp.eq.s32.totalorder %s30, 3
      %p268 = por %p266, %p267
      %p270 = scmp.ne.s32.totalorder %s253, %s269
      %p271 = scmp.eq.s32.totalorder %s30, 0
      %p272 = por %p270, %p271
      %s273 = ssub.s32 %s32, %s39
      %p274 = scmp.eq.s32.totalorder %s273, 0
      %s276 = sadd.s32 %s275, 1
      %s277 = scalar_select %p274, %s275, %s276
      %p280 = pneg %p274
      %p281 = scmp.eq.s32.totalorder %s24, 3
      %p282 = por %p280, %p281
      %p283 = scmp.ne.s32.totalorder %s275, %s278
      %p284 = scmp.eq.s32.totalorder %s24, 0
      %p285 = por %p283, %p284
      %p286 = scmp.ne.s32.totalorder %s275, %s278
      %p287 = scmp.eq.s32.totalorder %s29, 3
      %p288 = por %p286, %p287
      %p289 = scmp.ne.s32.totalorder %s278, %s279
      %p290 = scmp.eq.s32.totalorder %s29, 0
      %p291 = por %p289, %p290
      %p292 = scmp.ne.s32.totalorder %s278, %s279
      %p293 = scmp.eq.s32.totalorder %s30, 3
      %p294 = por %p292, %p293
      %p296 = scmp.ne.s32.totalorder %s279, %s295
      %p297 = scmp.eq.s32.totalorder %s30, 0
      %p298 = por %p296, %p297
      %s299 = ssub.s32 %s32, %s39
      %p300 = scmp.eq.s32.totalorder %s299, 0
      %s302 = sadd.s32 %s301, 1
      %s303 = scalar_select %p300, %s301, %s302
      %p306 = pneg %p300
      %p307 = scmp.eq.s32.totalorder %s24, 3
      %p308 = por %p306, %p307
      %p309 = scmp.ne.s32.totalorder %s301, %s304
      %p310 = scmp.eq.s32.totalorder %s24, 0
      %p311 = por %p309, %p310
      %p312 = scmp.ne.s32.totalorder %s301, %s304
      %p313 = scmp.eq.s32.totalorder %s29, 3
      %p314 = por %p312, %p313
      %p315 = scmp.ne.s32.totalorder %s304, %s305
      %p316 = scmp.eq.s32.totalorder %s29, 0
      %p317 = por %p315, %p316
      %p318 = scmp.ne.s32.totalorder %s304, %s305
      %p319 = scmp.eq.s32.totalorder %s30, 3
      %p320 = por %p318, %p319
      %p322 = scmp.ne.s32.totalorder %s305, %s321
      %p323 = scmp.eq.s32.totalorder %s30, 0
      %p324 = por %p322, %p323
      %s325 = ssub.s32 %s32, %s39
      %p326 = scmp.eq.s32.totalorder %s325, 0
      %s328 = sadd.s32 %s327, 1
      %s329 = scalar_select %p326, %s327, %s328
      %p332 = pneg %p326
      %p333 = scmp.eq.s32.totalorder %s24, 3
      %p334 = por %p332, %p333
      %p335 = scmp.ne.s32.totalorder %s327, %s330
      %p336 = scmp.eq.s32.totalorder %s24, 0
      %p337 = por %p335, %p336
      %p338 = scmp.ne.s32.totalorder %s327, %s330
      %p339 = scmp.eq.s32.totalorder %s29, 3
      %p340 = por %p338, %p339
      %p341 = scmp.ne.s32.totalorder %s330, %s331
      %p342 = scmp.eq.s32.totalorder %s29, 0
      %p343 = por %p341, %p342
      %p344 = scmp.ne.s32.totalorder %s330, %s331
      %p345 = scmp.eq.s32.totalorder %s30, 3
      %p346 = por %p344, %p345
      %p348 = scmp.ne.s32.totalorder %s331, %s347
      %p349 = scmp.eq.s32.totalorder %s30, 0
      %p350 = por %p348, %p349
      %s352 = sadd.s32 %s351, 1
      %p355 = scmp.eq.s32.totalorder %s24, 3
      %p356 = scmp.ne.s32.totalorder %s351, %s353
      %p357 = scmp.eq.s32.totalorder %s24, 0
      %p358 = por %p356, %p357
      %p359 = scmp.ne.s32.totalorder %s351, %s353
      %p360 = scmp.eq.s32.totalorder %s29, 3
      %p361 = por %p359, %p360
      %p362 = scmp.ne.s32.totalorder %s353, %s354
      %p363 = scmp.eq.s32.totalorder %s29, 0
      %p364 = por %p362, %p363
      %p365 = scmp.ne.s32.totalorder %s353, %s354
      %p366 = scmp.eq.s32.totalorder %s30, 3
      %p367 = por %p365, %p366
      %p369 = scmp.ne.s32.totalorder %s354, %s368
      %p370 = scmp.eq.s32.totalorder %s30, 0
      %p371 = por %p369, %p370
      %s373 = sadd.s32 %s372, 1
      %p376 = scmp.eq.s32.totalorder %s24, 3
      %p377 = scmp.ne.s32.totalorder %s372, %s374
      %p378 = scmp.eq.s32.totalorder %s24, 0
      %p379 = por %p377, %p378
      %p380 = scmp.ne.s32.totalorder %s372, %s374
      %p381 = scmp.eq.s32.totalorder %s29, 3
      %p382 = por %p380, %p381
      %p383 = scmp.ne.s32.totalorder %s374, %s375
      %p384 = scmp.eq.s32.totalorder %s29, 0
      %p385 = por %p383, %p384
      %p386 = scmp.ne.s32.totalorder %s374, %s375
      %p387 = scmp.eq.s32.totalorder %s30, 3
      %p388 = por %p386, %p387
      %p390 = scmp.ne.s32.totalorder %s375, %s389
      %p391 = scmp.eq.s32.totalorder %s30, 0
      %p392 = por %p390, %p391
      %s394 = sadd.s32 %s393, 1
      %p397 = scmp.eq.s32.totalorder %s24, 3
      %p398 = scmp.ne.s32.totalorder %s393, %s395
      %p399 = scmp.eq.s32.totalorder %s24, 0
      %p400 = por %p398, %p399
      %p401 = scmp.ne.s32.totalorder %s393, %s395
      %p402 = scmp.eq.s32.totalorder %s29, 3
      %p403 = por %p401, %p402
      %p404 = scmp.ne.s32.totalorder %s395, %s396
      %p405 = scmp.eq.s32.totalorder %s29, 0
      %p406 = por %p404, %p405
      %p407 = scmp.ne.s32.totalorder %s395, %s396
      %p408 = scmp.eq.s32.totalorder %s30, 3
      %p409 = por %p407, %p408
      %p411 = scmp.ne.s32.totalorder %s396, %s410
      %p412 = scmp.eq.s32.totalorder %s30, 0
      %p413 = por %p411, %p412
      %s414 = ssub.s32 %s31, %s43
      %p415 = scmp.eq.s32.totalorder %s414, 0
      %s417 = sadd.s32 %s416, 1
      %s418 = scalar_select %p415, %s416, %s417
      %p421 = pneg %p415
      %p422 = scmp.eq.s32.totalorder %s24, 3
      %p423 = por %p421, %p422
      %p424 = scmp.ne.s32.totalorder %s416, %s419
      %p425 = scmp.eq.s32.totalorder %s24, 0
      %p426 = por %p424, %p425
      %p427 = scmp.ne.s32.totalorder %s416, %s419
      %p428 = scmp.eq.s32.totalorder %s29, 3
      %p429 = por %p427, %p428
      %p430 = scmp.ne.s32.totalorder %s419, %s420
      %p431 = scmp.eq.s32.totalorder %s29, 0
      %p432 = por %p430, %p431
      %p433 = scmp.ne.s32.totalorder %s419, %s420
      %p434 = scmp.eq.s32.totalorder %s30, 3
      %p435 = por %p433, %p434
      %p437 = scmp.ne.s32.totalorder %s420, %s436
      %p438 = scmp.eq.s32.totalorder %s30, 0
      %p439 = por %p437, %p438
      %p440 = scmp.le.s32.totalorder 1, %s24
      %p441 = scmp.lt.s32.totalorder %s24, 5
      %p442 = pnand %p440, %p441
      %p443 = pneg %p442
      // Predicated region
      $region9: #{tpu_custom_call.1} parent=5 // pred_check
        _
      $region10: #{tpu_custom_call.1} parent=5 // pred_check_branch
        %445 = sbr.rel (%p442) target = $region12
      $region11: #{tpu_custom_call.1} parent=5 // pred_region
        %s446 = ssub.s32 %s24, 1
        // Predicated region
        $region13: #{tpu_custom_call.1} parent=11 // pred_check
          %p447 = pneg %p83
        $region14: #{tpu_custom_call.1} parent=11 // pred_check_branch
          %449 = sbr.rel (%p447) target = $region16
        $region15: #{tpu_custom_call.1} parent=11 // pred_region
          _
        $region16: #{tpu_custom_call.1} parent=11 // pred_fallthru
          _
        // Predicated region
        $region17: #{tpu_custom_call.1} parent=11 // pred_check
          %p450 = pneg %p364
        $region18: #{tpu_custom_call.1} parent=11 // pred_check_branch
          %452 = sbr.rel (%p450) target = $region20
        $region19: #{tpu_custom_call.1} parent=11 // pred_region
          _
        $region20: #{tpu_custom_call.1} parent=11 // pred_fallthru
          _
        // Predicated region
        $region21: #{tpu_custom_call.1} parent=11 // pred_check
          %p453 = pneg %p385
        $region22: #{tpu_custom_call.1} parent=11 // pred_check_branch
          %455 = sbr.rel (%p453) target = $region24
        $region23: #{tpu_custom_call.1} parent=11 // pred_region
          _
        $region24: #{tpu_custom_call.1} parent=11 // pred_fallthru
          _
        // Predicated region
        $region25: #{tpu_custom_call.1} parent=11 // pred_check
          %p456 = pneg %p406
        $region26: #{tpu_custom_call.1} parent=11 // pred_check_branch
          %458 = sbr.rel (%p456) target = $region28
        $region27: #{tpu_custom_call.1} parent=11 // pred_region
          _
        $region28: #{tpu_custom_call.1} parent=11 // pred_fallthru
          _
      $region12: #{tpu_custom_call.1} parent=5 // pred_fallthru
        _
      %p459 = scmp.lt.s32.totalorder %s24, 4
      // Predicated region
      $region29: #{tpu_custom_call.1} parent=5 // pred_check
        %p460 = pneg %p459
      $region30: #{tpu_custom_call.1} parent=5 // pred_check_branch
        %462 = sbr.rel (%p460) target = $region32
      $region31: #{tpu_custom_call.1} parent=5 // pred_region
        // Predicated region
        $region33: #{tpu_custom_call.1} parent=31 // pred_check
          %p463 = pneg %p56
        $region34: #{tpu_custom_call.1} parent=31 // pred_check_branch
          %465 = sbr.rel (%p463) target = $region36
        $region35: #{tpu_custom_call.1} parent=31 // pred_region
          %p466 = scmp.lt.s32.totalorder %s31, 1
          %s467 = scalar_select %p466, %s31, 1
          %s468 = smul.addr %s467, 2
          %s469 = smul.addr %s468, 4
          %s470 = scalar_lea.vmem %s0, %s469
        $region36: #{tpu_custom_call.1} parent=31 // pred_fallthru
          _
        // Predicated region
        $region37: #{tpu_custom_call.1} parent=31 // pred_check
          %p471 = pneg %p103
        $region38: #{tpu_custom_call.1} parent=31 // pred_check_branch
          %473 = sbr.rel (%p471) target = $region40
        $region39: #{tpu_custom_call.1} parent=31 // pred_region
          %p474 = scmp.lt.s32.totalorder %s32, 1
          %s475 = scalar_select %p474, %s32, 1
          %s476 = smul.addr %s475, 2
          %s477 = scalar_lea.vmem %s2, %s476
        $region40: #{tpu_custom_call.1} parent=31 // pred_fallthru
          _
        // Predicated region
        $region41: #{tpu_custom_call.1} parent=31 // pred_check
          %p478 = pneg %p129
        $region42: #{tpu_custom_call.1} parent=31 // pred_check_branch
          %480 = sbr.rel (%p478) target = $region44
        $region43: #{tpu_custom_call.1} parent=31 // pred_region
          %p481 = scmp.lt.s32.totalorder %s32, 1
          %s482 = scalar_select %p481, %s32, 1
          %s483 = smul.addr %s482, 2
          %s484 = smul.addr %s483, 4
          %s485 = scalar_lea.vmem %s3, %s484
        $region44: #{tpu_custom_call.1} parent=31 // pred_fallthru
          _
        // Predicated region
        $region45: #{tpu_custom_call.1} parent=31 // pred_check
          %p486 = pneg %p155
        $region46: #{tpu_custom_call.1} parent=31 // pred_check_branch
          %488 = sbr.rel (%p486) target = $region48
        $region47: #{tpu_custom_call.1} parent=31 // pred_region
          %p489 = scmp.lt.s32.totalorder %s32, 1
          %s490 = scalar_select %p489, %s32, 1
          %s491 = smul.addr %s490, 16
          %s492 = smul.addr %s491, 8
          %s493 = scalar_lea.vmem %s4, %s492
        $region48: #{tpu_custom_call.1} parent=31 // pred_fallthru
          _
        // Predicated region
        $region49: #{tpu_custom_call.1} parent=31 // pred_check
          %p494 = pneg %p181
        $region50: #{tpu_custom_call.1} parent=31 // pred_check_branch
          %496 = sbr.rel (%p494) target = $region52
        $region51: #{tpu_custom_call.1} parent=31 // pred_region
          %p497 = scmp.lt.s32.totalorder %s32, 1
          %s498 = scalar_select %p497, %s32, 1
          %s499 = smul.addr %s498, 16
          %s500 = smul.addr %s499, 4
          %s501 = scalar_lea.vmem %s5, %s500
        $region52: #{tpu_custom_call.1} parent=31 // pred_fallthru
          _
        // Predicated region
        $region53: #{tpu_custom_call.1} parent=31 // pred_check
          %p502 = pneg %p207
        $region54: #{tpu_custom_call.1} parent=31 // pred_check_branch
          %504 = sbr.rel (%p502) target = $region56
        $region55: #{tpu_custom_call.1} parent=31 // pred_region
          %p505 = scmp.lt.s32.totalorder %s32, 1
          %s506 = scalar_select %p505, %s32, 1
          %s507 = smul.addr %s506, 2
          %s508 = smul.addr %s507, 8
          %s509 = scalar_lea.vmem %s6, %s508
        $region56: #{tpu_custom_call.1} parent=31 // pred_fallthru
          _
        // Predicated region
        $region57: #{tpu_custom_call.1} parent=31 // pred_check
          %p510 = pneg %p233
        $region58: #{tpu_custom_call.1} parent=31 // pred_check_branch
          %512 = sbr.rel (%p510) target = $region60
        $region59: #{tpu_custom_call.1} parent=31 // pred_region
          %p513 = scmp.lt.s32.totalorder %s32, 1
          %s514 = scalar_select %p513, %s32, 1
          %s515 = smul.addr %s514, 2
          %s516 = scalar_lea.vmem %s7, %s515
        $region60: #{tpu_custom_call.1} parent=31 // pred_fallthru
          _
        // Predicated region
        $region61: #{tpu_custom_call.1} parent=31 // pred_check
          %p517 = pneg %p259
        $region62: #{tpu_custom_call.1} parent=31 // pred_check_branch
          %519 = sbr.rel (%p517) target = $region64
        $region63: #{tpu_custom_call.1} parent=31 // pred_region
          %p520 = scmp.lt.s32.totalorder %s32, 1
          %s521 = scalar_select %p520, %s32, 1
          %s522 = smul.addr %s521, 16
          %s523 = smul.addr %s522, 4
          %s524 = scalar_lea.vmem %s8, %s523
        $region64: #{tpu_custom_call.1} parent=31 // pred_fallthru
          _
        // Predicated region
        $region65: #{tpu_custom_call.1} parent=31 // pred_check
          %p525 = pneg %p285
        $region66: #{tpu_custom_call.1} parent=31 // pred_check_branch
          %527 = sbr.rel (%p525) target = $region68
        $region67: #{tpu_custom_call.1} parent=31 // pred_region
          %p528 = scmp.lt.s32.totalorder %s32, 1
          %s529 = scalar_select %p528, %s32, 1
          %s530 = scalar_lea.vmem %s9, %s529
        $region68: #{tpu_custom_call.1} parent=31 // pred_fallthru
          _
        // Predicated region
        $region69: #{tpu_custom_call.1} parent=31 // pred_check
          %p531 = pneg %p311
        $region70: #{tpu_custom_call.1} parent=31 // pred_check_branch
          %533 = sbr.rel (%p531) target = $region72
        $region71: #{tpu_custom_call.1} parent=31 // pred_region
          %p534 = scmp.lt.s32.totalorder %s32, 1
          %s535 = scalar_select %p534, %s32, 1
          %s536 = smul.addr %s535, 16
          %s537 = smul.addr %s536, 4
          %s538 = scalar_lea.vmem %s10, %s537
        $region72: #{tpu_custom_call.1} parent=31 // pred_fallthru
          _
        // Predicated region
        $region73: #{tpu_custom_call.1} parent=31 // pred_check
          %p539 = pneg %p337
        $region74: #{tpu_custom_call.1} parent=31 // pred_check_branch
          %541 = sbr.rel (%p539) target = $region76
        $region75: #{tpu_custom_call.1} parent=31 // pred_region
          %p542 = scmp.lt.s32.totalorder %s32, 1
          %s543 = scalar_select %p542, %s32, 1
          %s544 = scalar_lea.vmem %s11, %s543
        $region76: #{tpu_custom_call.1} parent=31 // pred_fallthru
          _
      $region32: #{tpu_custom_call.1} parent=5 // pred_fallthru
        _
      %p545 = scmp.le.s32.totalorder 1, %s24
      %p546 = scmp.lt.s32.totalorder %s24, 5
      %p547 = pnand %p545, %p546
      %p548 = pneg %p547
      // Predicated region
      $region77: #{tpu_custom_call.1} parent=5 // pred_check
        _
      $region78: #{tpu_custom_call.1} parent=5 // pred_check_branch
        %550 = sbr.rel (%p547) target = $region80
      $region79: #{tpu_custom_call.1} parent=5 // pred_region
        %s551 = ssub.s32 %s24, 1
        %p552 = scmp.lt.s32.totalorder %s33, 1
        %s553 = scalar_select %p552, %s33, 1
        %s554 = smul.addr %s553, 2
        %s555 = smul.addr %s554, 4
        %s556 = scalar_lea.vmem %s0, %s555
        %p557 = pneg %p62
        %p558 = pneg %p59
        %p559 = pneg %p83
        %p560 = pneg %p80
        %p561 = scmp.lt.s32.totalorder %s34, 1
        %s562 = scalar_select %p561, %s34, 1
        %s563 = smul.addr %s562, 2
        %s564 = scalar_lea.vmem %s2, %s563
        %p565 = pneg %p109
        %p566 = pneg %p106
        %p567 = scmp.lt.s32.totalorder %s34, 1
        %s568 = scalar_select %p567, %s34, 1
        %s569 = smul.addr %s568, 2
        %s570 = smul.addr %s569, 4
        %s571 = scalar_lea.vmem %s3, %s570
        %p572 = pneg %p135
        %p573 = pneg %p132
        %p574 = scmp.lt.s32.totalorder %s34, 1
        %s575 = scalar_select %p574, %s34, 1
        %s576 = smul.addr %s575, 16
        %s577 = smul.addr %s576, 8
        %s578 = scalar_lea.vmem %s4, %s577
        %p579 = pneg %p161
        %p580 = pneg %p158
        %p581 = scmp.lt.s32.totalorder %s34, 1
        %s582 = scalar_select %p581, %s34, 1
        %s583 = smul.addr %s582, 16
        %s584 = smul.addr %s583, 4
        %s585 = scalar_lea.vmem %s5, %s584
        %p586 = pneg %p187
        %p587 = pneg %p184
        %p588 = scmp.lt.s32.totalorder %s34, 1
        %s589 = scalar_select %p588, %s34, 1
        %s590 = smul.addr %s589, 2
        %s591 = smul.addr %s590, 8
        %s592 = scalar_lea.vmem %s6, %s591
        %p593 = pneg %p213
        %p594 = pneg %p210
        %p595 = scmp.lt.s32.totalorder %s34, 1
        %s596 = scalar_select %p595, %s34, 1
        %s597 = smul.addr %s596, 2
        %s598 = scalar_lea.vmem %s7, %s597
        %p599 = pneg %p239
        %p600 = pneg %p236
        %p601 = scmp.lt.s32.totalorder %s34, 1
        %s602 = scalar_select %p601, %s34, 1
        %s603 = smul.addr %s602, 16
        %s604 = smul.addr %s603, 4
        %s605 = scalar_lea.vmem %s8, %s604
        %p606 = pneg %p265
        %p607 = pneg %p262
        %p608 = scmp.lt.s32.totalorder %s34, 1
        %s609 = scalar_select %p608, %s34, 1
        %s610 = scalar_lea.vmem %s9, %s609
        %p611 = pneg %p291
        %p612 = pneg %p288
        %p613 = scmp.lt.s32.totalorder %s34, 1
        %s614 = scalar_select %p613, %s34, 1
        %s615 = smul.addr %s614, 16
        %s616 = smul.addr %s615, 4
        %s617 = scalar_lea.vmem %s10, %s616
        %p618 = pneg %p317
        %p619 = pneg %p314
        %p620 = scmp.lt.s32.totalorder %s34, 1
        %s621 = scalar_select %p620, %s34, 1
        %s622 = scalar_lea.vmem %s11, %s621
        %p623 = pneg %p343
        %p624 = pneg %p340
        %p625 = pneg %p364
        %p626 = pneg %p361
        %p627 = pneg %p385
        %p628 = pneg %p382
        %p629 = pneg %p406
        %p630 = pneg %p403
        %p631 = pneg %p432
        %p632 = pneg %p429
        %s633 = sand.u32 %s419, 1
        %s634 = scalar_lea.sflag [#allocation4], %s633
        %s635 = sand.u32 %s419, 1
        %s636 = scalar_lea.vmem [#allocation3], %s635
        %p637 = scmp.lt.s32.totalorder %s33, 1
        %s638 = scalar_select %p637, %s33, 1
        %s639 = smul.addr %s638, 2
        %s640 = smul.addr %s639, 4
        %s641 = scalar_lea.vmem %s0, %s640
        %p642 = scmp.lt.s32.totalorder %s34, 1
        %s643 = scalar_select %p642, %s34, 1
        %s644 = smul.addr %s643, 2
        %s645 = scalar_lea.vmem %s2, %s644
        %p646 = scmp.lt.s32.totalorder %s34, 1
        %s647 = scalar_select %p646, %s34, 1
        %s648 = smul.addr %s647, 2
        %s649 = smul.addr %s648, 4
        %s650 = scalar_lea.vmem %s3, %s649
        %p651 = scmp.lt.s32.totalorder %s34, 1
        %s652 = scalar_select %p651, %s34, 1
        %s653 = smul.addr %s652, 16
        %s654 = smul.addr %s653, 8
        %s655 = scalar_lea.vmem %s4, %s654
        %p656 = scmp.lt.s32.totalorder %s34, 1
        %s657 = scalar_select %p656, %s34, 1
        %s658 = smul.addr %s657, 16
        %s659 = smul.addr %s658, 4
        %s660 = scalar_lea.vmem %s5, %s659
        %p661 = scmp.lt.s32.totalorder %s34, 1
        %s662 = scalar_select %p661, %s34, 1
        %s663 = smul.addr %s662, 2
        %s664 = smul.addr %s663, 8
        %s665 = scalar_lea.vmem %s6, %s664
        %p666 = scmp.lt.s32.totalorder %s34, 1
        %s667 = scalar_select %p666, %s34, 1
        %s668 = smul.addr %s667, 2
        %s669 = scalar_lea.vmem %s7, %s668
        %p670 = scmp.lt.s32.totalorder %s34, 1
        %s671 = scalar_select %p670, %s34, 1
        %s672 = smul.addr %s671, 16
        %s673 = smul.addr %s672, 4
        %s674 = scalar_lea.vmem %s8, %s673
        %p675 = scmp.lt.s32.totalorder %s34, 1
        %s676 = scalar_select %p675, %s34, 1
        %s677 = scalar_lea.vmem %s9, %s676
        %p678 = scmp.lt.s32.totalorder %s34, 1
        %s679 = scalar_select %p678, %s34, 1
        %s680 = smul.addr %s679, 16
        %s681 = smul.addr %s680, 4
        %s682 = scalar_lea.vmem %s10, %s681
        %p683 = scmp.lt.s32.totalorder %s34, 1
        %s684 = scalar_select %p683, %s34, 1
        %s685 = scalar_lea.vmem %s11, %s684
        %v687 = vlaneseq
        %v688 = vand.u32 %v687, 127
        %vm689 = vcmp.lt.s32.totalorder %v688, 32
        %v690 = vsel %vm689, 1, 0
        %v691 = vcvt.s32.f32 %v690
        %p692 = scmp.eq.s32.totalorder %s34, 0
        // Predicated region
        $region81: #{tpu_custom_call.1} parent=79 // pred_check
          %p693 = pneg %p692
        $region82: #{tpu_custom_call.1} parent=79 // pred_check_branch
          %695 = sbr.rel (%p693) target = $region84
        $region83: #{tpu_custom_call.1} parent=79 // pred_region
          %v696 = vld [vmem:[%s641] sm:$0xf]
          %v697 = vld [vmem:[%s641 + $0x4] sm:$0xf]
          %v698 = vld [vmem:[%s1] sm:$0xf]
          %v699 = vld [vmem:[%s1 + $0x4] sm:$0xf]
          %v700 = vld [vmem:[%s1 + $0x8] sm:$0xf]
          %v701 = vld [vmem:[%s1 + $0xc] sm:$0xf]
          %v702 = vld [vmem:[%s1 + $0x10] sm:$0xf]
          %v703 = vld [vmem:[%s1 + $0x14] sm:$0xf]
          %v704 = vld [vmem:[%s1 + $0x18] sm:$0xf]
          %v705 = vld [vmem:[%s1 + $0x1c] sm:$0xf]
          %v706 = vld [vmem:[%s1 + $0x20] sm:$0xf]
          %v707 = vld [vmem:[%s1 + $0x24] sm:$0xf]
          %v708 = vld [vmem:[%s1 + $0x28] sm:$0xf]
          %v709 = vld [vmem:[%s1 + $0x2c] sm:$0xf]
          %v710 = vld [vmem:[%s1 + $0x30] sm:$0xf]
          %v711 = vld [vmem:[%s1 + $0x34] sm:$0xf]
          %v712 = vld [vmem:[%s1 + $0x38] sm:$0xf]
          %v713 = vld [vmem:[%s1 + $0x3c] sm:$0xf]
          %v716 = vunpack.c.l.b16 %v696
          %v717 = vunpack.c.l.b16 %v697
          %v718 = vpack.c.b16 %v717, %v716
          %v736 = vunpack.c.l.b16 %v698
          %v737 = vunpack.c.l.b16 %v699
          %v738 = vunpack.c.l.b16 %v700
          %v739 = vunpack.c.l.b16 %v701
          %v740 = vunpack.c.l.b16 %v702
          %v741 = vunpack.c.l.b16 %v703
          %v742 = vunpack.c.l.b16 %v704
          %v743 = vunpack.c.l.b16 %v705
          %v744 = vunpack.c.l.b16 %v706
          %v745 = vunpack.c.l.b16 %v707
          %v746 = vunpack.c.l.b16 %v708
          %v747 = vunpack.c.l.b16 %v709
          %v748 = vunpack.c.l.b16 %v710
          %v749 = vunpack.c.l.b16 %v711
          %v750 = vunpack.c.l.b16 %v712
          %v751 = vunpack.c.l.b16 %v713
          %v752 = vpack.c.b16 %v737, %v736
          %v753 = vpack.c.b16 %v739, %v738
          %v754 = vpack.c.b16 %v741, %v740
          %v755 = vpack.c.b16 %v743, %v742
          %v756 = vpack.c.b16 %v745, %v744
          %v757 = vpack.c.b16 %v747, %v746
          %v758 = vpack.c.b16 %v749, %v748
          %v759 = vpack.c.b16 %v751, %v750
          %768 = vmatprep.subr.bf16.mxu0 0
          %769 = vmatpush1.bf16.msra.mxu0 %v759
          %770 = vmatprep.subr.bf16.mxu0 0
          %771 = vmatpush1.bf16.msra.mxu0 %v758
          %772 = vmatprep.subr.bf16.mxu0 0
          %773 = vmatpush1.bf16.msra.mxu0 %v757
          %774 = vmatprep.subr.bf16.mxu0 0
          %775 = vmatpush1.bf16.msra.mxu0 %v756
          %776 = vmatprep.subr.bf16.mxu0 0
          %777 = vmatpush1.bf16.msra.mxu0 %v755
          %778 = vmatprep.subr.bf16.mxu0 0
          %779 = vmatpush1.bf16.msra.mxu0 %v754
          %780 = vmatprep.subr.bf16.mxu0 0
          %781 = vmatpush1.bf16.msra.mxu0 %v753
          %782 = vmatprep.subr.bf16.mxu0 0
          %783 = vmatpush1.bf16.msra.mxu0 %v752
          %784 = vmatprep.subr.bf16.mxu0 0
          %785 = vmatpush2.bf16.msra.mxu0 0
          %786 = vmatprep.subr.bf16.mxu0 0
          %787 = vmatpush2.bf16.msra.mxu0 0
          %788 = vmatprep.subr.bf16.mxu0 0
          %789 = vmatpush2.bf16.msra.mxu0 0
          %790 = vmatprep.subr.bf16.mxu0 0
          %791 = vmatpush2.bf16.msra.mxu0 0
          %792 = vmatprep.subr.bf16.mxu0 0
          %793 = vmatpush2.bf16.msra.mxu0 0
          %794 = vmatprep.subr.bf16.mxu0 0
          %795 = vmatpush2.bf16.msra.mxu0 0
          %796 = vmatprep.subr.bf16.mxu0 0
          %797 = vmatpush2.bf16.msra.mxu0 0
          %798 = vmatprep.subr.bf16.mxu0 0
          %799 = vmatpush2.bf16.msra.mxu0 0
          %800 = vmatprep.mubr.bf16.mxu0 0
          %801 = vmatmul.mubr.bf16.gmra.mxu0 %v718
          %v802 = vpop.f32.mrf.mxu0
          %v803 = vadd.f32 0.0, %v802
          %v804 = vpop.f32.mrf.mxu0
          %v805 = vpop.f32.mrf.mxu0
          %v806 = vadd.f32 0.0, %v805
          %v807 = vpop.f32.mrf.mxu0
          %808 = vdwg.mxu0
          %809 = vst [vmem:[#allocation2] sm:$0xff] %v803
          %810 = vst [vmem:[#allocation2 + $0x8] sm:$0xff] %v806
        $region84: #{tpu_custom_call.1} parent=79 // pred_fallthru
          _
        %v811 = vld [vmem:[#allocation2] sm:$0xff]
        %v812 = vld [vmem:[#allocation2 + $0x8] sm:$0xff]
        %v813 = vld [vmem:[%s645] sm:$0x3]
        %v814 = vmul.f32 %v811, %v691
        %v815 = vmul.f32 %v812, %v691
        %816 = vadd.xlane.f32.xlu0 %v814
        %v817 = vpop.xlane.xlu0 %816
        %818 = vadd.xlane.f32.xlu0 %v815
        %v819 = vpop.xlane.xlu0 %818
        %v820 = vmul.f32 %v817, 0.03125
        %v821 = vmul.f32 %v819, 0.03125
        %v822 = vsub.f32 %v811, %v820
        %v823 = vsub.f32 %v812, %v821
        %v824 = vmul.f32 %v822, %v691
        %v825 = vmul.f32 %v823, %v691
        %v826 = vmul.f32 %v824, %v824
        %v827 = vmul.f32 %v825, %v825
        %828 = vadd.xlane.f32.xlu0 %v826
        %v829 = vpop.xlane.xlu0 %828
        %830 = vadd.xlane.f32.xlu0 %v827
        %v831 = vpop.xlane.xlu0 %830
        %v832 = vmul.f32 %v829, 0.03125
        %v833 = vmul.f32 %v831, 0.03125
        %v834 = vadd.f32 %v832, 1e-06
        %v835 = vadd.f32 %v833, 1e-06
        %v836 = vrsqrt.pop %v834
        %v837 = vrsqrt.pop %v835
        %v838 = vmul.f32 %v824, %v836
        %v839 = vmul.f32 %v825, %v837
        %v840 = vlaneseq
        %v841 = vshrl.u32 %v840, 7
        %v842 = vsub.s32 0, %v841
        %v843 = vrot.slane %v813, %v842
        %v844 = vmul.f32 %v838, %v843
        %v845 = vmul.f32 %v839, %v843
        %v846 = vlaneseq
        %v847 = vshrl.u32 %v846, 7
        %v848 = vsub.s32 1, %v847
        %v849 = vrot.slane %v813, %v848
        %v850 = vadd.f32 %v844, %v849
        %v851 = vadd.f32 %v845, %v849
        %v852 = vpack.c.bf16 %v851, %v850
        %v853 = vld [vmem:[%s650] sm:$0xf]
        %v854 = vld [vmem:[%s650 + $0x4] sm:$0xf]
        %v855 = vld [vmem:[%s655] sm:$0xff]
        %v856 = vld [vmem:[%s655 + $0x8] sm:$0xff]
        %v857 = vld [vmem:[%s655 + $0x10] sm:$0xff]
        %v858 = vld [vmem:[%s655 + $0x18] sm:$0xff]
        %v859 = vld [vmem:[%s655 + $0x20] sm:$0xff]
        %v860 = vld [vmem:[%s655 + $0x28] sm:$0xff]
        %v861 = vld [vmem:[%s655 + $0x30] sm:$0xff]
        %v862 = vld [vmem:[%s655 + $0x38] sm:$0xff]
        %v863 = vld [vmem:[%s655 + $0x40] sm:$0xff]
        %v864 = vld [vmem:[%s655 + $0x48] sm:$0xff]
        %v865 = vld [vmem:[%s655 + $0x50] sm:$0xff]
        %v866 = vld [vmem:[%s655 + $0x58] sm:$0xff]
        %v867 = vld [vmem:[%s655 + $0x60] sm:$0xff]
        %v868 = vld [vmem:[%s655 + $0x68] sm:$0xff]
        %v869 = vld [vmem:[%s655 + $0x70] sm:$0xff]
        %v870 = vld [vmem:[%s655 + $0x78] sm:$0xff]
        %872 = vset.pattern.permute.xlu0 0
        %873 = vperm.xlu0 %872, %v855
        %v874 = vpop.permute.xlu0 %873
        %877 = vset.pattern.permute.xlu0 0
        %878 = vperm.xlu0 %877, %v856
        %v879 = vpop.permute.xlu0 %878
        %882 = vset.pattern.permute.xlu0 0
        %883 = vperm.xlu0 %882, %v857
        %v884 = vpop.permute.xlu0 %883
        %887 = vset.pattern.permute.xlu0 0
        %888 = vperm.xlu0 %887, %v858
        %v889 = vpop.permute.xlu0 %888
        %892 = vset.pattern.permute.xlu0 0
        %893 = vperm.xlu0 %892, %v859
        %v894 = vpop.permute.xlu0 %893
        %897 = vset.pattern.permute.xlu0 0
        %898 = vperm.xlu0 %897, %v860
        %v899 = vpop.permute.xlu0 %898
        %902 = vset.pattern.permute.xlu0 0
        %903 = vperm.xlu0 %902, %v861
        %v904 = vpop.permute.xlu0 %903
        %907 = vset.pattern.permute.xlu0 0
        %908 = vperm.xlu0 %907, %v862
        %v909 = vpop.permute.xlu0 %908
        %912 = vset.pattern.permute.xlu0 0
        %913 = vperm.xlu0 %912, %v863
        %v914 = vpop.permute.xlu0 %913
        %917 = vset.pattern.permute.xlu0 0
        %918 = vperm.xlu0 %917, %v864
        %v919 = vpop.permute.xlu0 %918
        %922 = vset.pattern.permute.xlu0 0
        %923 = vperm.xlu0 %922, %v865
        %v924 = vpop.permute.xlu0 %923
        %927 = vset.pattern.permute.xlu0 0
        %928 = vperm.xlu0 %927, %v866
        %v929 = vpop.permute.xlu0 %928
        %932 = vset.pattern.permute.xlu0 0
        %933 = vperm.xlu0 %932, %v867
        %v934 = vpop.permute.xlu0 %933
        %937 = vset.pattern.permute.xlu0 0
        %938 = vperm.xlu0 %937, %v868
        %v939 = vpop.permute.xlu0 %938
        %942 = vset.pattern.permute.xlu0 0
        %943 = vperm.xlu0 %942, %v869
        %v944 = vpop.permute.xlu0 %943
        %947 = vset.pattern.permute.xlu0 0
        %948 = vperm.xlu0 %947, %v870
        %v949 = vpop.permute.xlu0 %948
        %v953 = vunpack.c.l.b16 %v853
        %v954 = vunpack.c.l.b16 %v854
        %v955 = vpack.c.b16 %v954, %v953
        %957 = vxpose.xlu0.c.b16.start [1/8] %v955, 128
        %958 = vxpose.xlu0.c.b16.cont [2/8] 0, 128
        %959 = vxpose.xlu0.c.b16.cont [3/8] 0, 128
        %960 = vxpose.xlu0.c.b16.cont [4/8] 0, 128
        %961 = vxpose.xlu0.c.b16.cont [5/8] 0, 128
        %962 = vxpose.xlu0.c.b16.cont [6/8] 0, 128
        %963 = vxpose.xlu0.c.b16.cont [7/8] 0, 128
        %964 = vxpose.xlu0.c.b16.end [8/8] 0, 128
        %v965 = vpop.trf.xlu0
        %v966 = vpop.trf.xlu0
        %v967 = vpop.trf.xlu0
        %v968 = vpop.trf.xlu0
        %v969 = vpop.trf.xlu0
        %v970 = vpop.trf.xlu0
        %v971 = vpop.trf.xlu0
        %v972 = vpop.trf.xlu0
        %vm973 = vcmask 130048
        %v975 = vsel %vm973, %v965, 0
        %v978 = vsel %vm973, %v966, 0
        %v981 = vsel %vm973, %v967, 0
        %v984 = vsel %vm973, %v968, 0
        %v987 = vsel %vm973, %v969, 0
        %v990 = vsel %vm973, %v970, 0
        %v993 = vsel %vm973, %v971, 0
        %v996 = vsel %vm973, %v972, 0
        %998 = vmatprep.subr.bf16.mxu0 0
        %999 = vmatpush1.bf16.msra.mxu0 0
        %1000 = vmatprep.subr.bf16.mxu0 0
        %1001 = vmatpush1.bf16.msra.mxu0 0
        %1002 = vmatprep.subr.bf16.mxu0 0
        %1003 = vmatpush1.bf16.msra.mxu0 0
        %1004 = vmatprep.subr.bf16.mxu0 0
        %1005 = vmatpush1.bf16.msra.mxu0 0
        %1006 = vmatprep.subr.bf16.mxu0 0
        %1007 = vmatpush1.bf16.msra.mxu0 0
        %1008 = vmatprep.subr.bf16.mxu0 0
        %1009 = vmatpush1.bf16.msra.mxu0 0
        %1010 = vmatprep.subr.bf16.mxu0 0
        %1011 = vmatpush1.bf16.msra.mxu0 0
        %1012 = vmatprep.subr.bf16.mxu0 0
        %1013 = vmatpush1.bf16.msra.mxu0 %v852
        %1014 = vmatprep.subr.bf16.mxu0 0
        %1015 = vmatpush2.bf16.msra.mxu0 0
        %1016 = vmatprep.subr.bf16.mxu0 0
        %1017 = vmatpush2.bf16.msra.mxu0 0
        %1018 = vmatprep.subr.bf16.mxu0 0
        %1019 = vmatpush2.bf16.msra.mxu0 0
        %1020 = vmatprep.subr.bf16.mxu0 0
        %1021 = vmatpush2.bf16.msra.mxu0 0
        %1022 = vmatprep.subr.bf16.mxu0 0
        %1023 = vmatpush2.bf16.msra.mxu0 0
        %1024 = vmatprep.subr.bf16.mxu0 0
        %1025 = vmatpush2.bf16.msra.mxu0 0
        %1026 = vmatprep.subr.bf16.mxu0 0
        %1027 = vmatpush2.bf16.msra.mxu0 0
        %1028 = vmatprep.subr.bf16.mxu0 0
        %1029 = vmatpush2.bf16.msra.mxu0 0
        %1030 = vmatprep.mubr.bf16.mxu0 0
        %1031 = vmatmul.mubr.bf16.gmra.mxu0 %v975
        %v1032 = vpop.f32.mrf.mxu0
        %v1033 = vadd.f32 %v874, %v1032
        %v1034 = vpop.f32.mrf.mxu0
        %v1035 = vpop.f32.mrf.mxu0
        %v1036 = vadd.f32 %v879, %v1035
        %v1037 = vpop.f32.mrf.mxu0
        %1038 = vmatprep.mubr.bf16.mxu0 0
        %1039 = vmatmul.mubr.bf16.gmra.mxu0 %v978
        %v1040 = vpop.f32.mrf.mxu0
        %v1041 = vadd.f32 %v884, %v1040
        %v1042 = vpop.f32.mrf.mxu0
        %v1043 = vpop.f32.mrf.mxu0
        %v1044 = vadd.f32 %v889, %v1043
        %v1045 = vpop.f32.mrf.mxu0
        %1046 = vmatprep.mubr.bf16.mxu0 0
        %1047 = vmatmul.mubr.bf16.gmra.mxu0 %v981
        %v1048 = vpop.f32.mrf.mxu0
        %v1049 = vadd.f32 %v894, %v1048
        %v1050 = vpop.f32.mrf.mxu0
        %v1051 = vpop.f32.mrf.mxu0
        %v1052 = vadd.f32 %v899, %v1051
        %v1053 = vpop.f32.mrf.mxu0
        %1054 = vmatprep.mubr.bf16.mxu0 0
        %1055 = vmatmul.mubr.bf16.gmra.mxu0 %v984
        %v1056 = vpop.f32.mrf.mxu0
        %v1057 = vadd.f32 %v904, %v1056
        %v1058 = vpop.f32.mrf.mxu0
        %v1059 = vpop.f32.mrf.mxu0
        %v1060 = vadd.f32 %v909, %v1059
        %v1061 = vpop.f32.mrf.mxu0
        %1062 = vmatprep.mubr.bf16.mxu0 0
        %1063 = vmatmul.mubr.bf16.gmra.mxu0 %v987
        %v1064 = vpop.f32.mrf.mxu0
        %v1065 = vadd.f32 %v914, %v1064
        %v1066 = vpop.f32.mrf.mxu0
        %v1067 = vpop.f32.mrf.mxu0
        %v1068 = vadd.f32 %v919, %v1067
        %v1069 = vpop.f32.mrf.mxu0
        %1070 = vmatprep.mubr.bf16.mxu0 0
        %1071 = vmatmul.mubr.bf16.gmra.mxu0 %v990
        %v1072 = vpop.f32.mrf.mxu0
        %v1073 = vadd.f32 %v924, %v1072
        %v1074 = vpop.f32.mrf.mxu0
        %v1075 = vpop.f32.mrf.mxu0
        %v1076 = vadd.f32 %v929, %v1075
        %v1077 = vpop.f32.mrf.mxu0
        %1078 = vmatprep.mubr.bf16.mxu0 0
        %1079 = vmatmul.mubr.bf16.gmra.mxu0 %v993
        %v1080 = vpop.f32.mrf.mxu0
        %v1081 = vadd.f32 %v934, %v1080
        %v1082 = vpop.f32.mrf.mxu0
        %v1083 = vpop.f32.mrf.mxu0
        %v1084 = vadd.f32 %v939, %v1083
        %v1085 = vpop.f32.mrf.mxu0
        %1086 = vmatprep.mubr.bf16.mxu0 0
        %1087 = vmatmul.mubr.bf16.gmra.mxu0 %v996
        %v1088 = vpop.f32.mrf.mxu0
        %v1089 = vadd.f32 %v944, %v1088
        %v1090 = vpop.f32.mrf.mxu0
        %v1091 = vpop.f32.mrf.mxu0
        %v1092 = vadd.f32 %v949, %v1091
        %v1093 = vpop.f32.mrf.mxu0
        %1094 = vdwg.mxu0
        %v1095 = vmul.f32 %v1033, 0.5
        %v1096 = vmul.f32 %v1036, 0.5
        %v1097 = vmul.f32 %v1041, 0.5
        %v1098 = vmul.f32 %v1044, 0.5
        %v1099 = vmul.f32 %v1049, 0.5
        %v1100 = vmul.f32 %v1052, 0.5
        %v1101 = vmul.f32 %v1057, 0.5
        %v1102 = vmul.f32 %v1060, 0.5
        %v1103 = vmul.f32 %v1065, 0.5
        %v1104 = vmul.f32 %v1068, 0.5
        %v1105 = vmul.f32 %v1073, 0.5
        %v1106 = vmul.f32 %v1076, 0.5
        %v1107 = vmul.f32 %v1081, 0.5
        %v1108 = vmul.f32 %v1084, 0.5
        %v1109 = vmul.f32 %v1089, 0.5
        %v1110 = vmul.f32 %v1092, 0.5
        %v1111 = vmul.f32 %v1033, 0.70710677
        %v1112 = vmul.f32 %v1036, 0.70710677
        %v1113 = vmul.f32 %v1041, 0.70710677
        %v1114 = vmul.f32 %v1044, 0.70710677
        %v1115 = vmul.f32 %v1049, 0.70710677
        %v1116 = vmul.f32 %v1052, 0.70710677
        %v1117 = vmul.f32 %v1057, 0.70710677
        %v1118 = vmul.f32 %v1060, 0.70710677
        %v1119 = vmul.f32 %v1065, 0.70710677
        %v1120 = vmul.f32 %v1068, 0.70710677
        %v1121 = vmul.f32 %v1073, 0.70710677
        %v1122 = vmul.f32 %v1076, 0.70710677
        %v1123 = vmul.f32 %v1081, 0.70710677
        %v1124 = vmul.f32 %v1084, 0.70710677
        %v1125 = vmul.f32 %v1089, 0.70710677
        %v1126 = vmul.f32 %v1092, 0.70710677
        %v1127 = verf.f32.pop %v1111
        %v1128 = verf.f32.pop %v1112
        %v1129 = verf.f32.pop %v1113
        %v1130 = verf.f32.pop %v1114
        %v1131 = verf.f32.pop %v1115
        %v1132 = verf.f32.pop %v1116
        %v1133 = verf.f32.pop %v1117
        %v1134 = verf.f32.pop %v1118
        %v1135 = verf.f32.pop %v1119
        %v1136 = verf.f32.pop %v1120
        %v1137 = verf.f32.pop %v1121
        %v1138 = verf.f32.pop %v1122
        %v1139 = verf.f32.pop %v1123
        %v1140 = verf.f32.pop %v1124
        %v1141 = verf.f32.pop %v1125
        %v1142 = verf.f32.pop %v1126
        %v1143 = vadd.f32 %v1127, 1.0
        %v1144 = vadd.f32 %v1128, 1.0
        %v1145 = vadd.f32 %v1129, 1.0
        %v1146 = vadd.f32 %v1130, 1.0
        %v1147 = vadd.f32 %v1131, 1.0
        %v1148 = vadd.f32 %v1132, 1.0
        %v1149 = vadd.f32 %v1133, 1.0
        %v1150 = vadd.f32 %v1134, 1.0
        %v1151 = vadd.f32 %v1135, 1.0
        %v1152 = vadd.f32 %v1136, 1.0
        %v1153 = vadd.f32 %v1137, 1.0
        %v1154 = vadd.f32 %v1138, 1.0
        %v1155 = vadd.f32 %v1139, 1.0
        %v1156 = vadd.f32 %v1140, 1.0
        %v1157 = vadd.f32 %v1141, 1.0
        %v1158 = vadd.f32 %v1142, 1.0
        %v1159 = vmul.f32 %v1095, %v1143
        %v1160 = vmul.f32 %v1096, %v1144
        %v1161 = vmul.f32 %v1097, %v1145
        %v1162 = vmul.f32 %v1098, %v1146
        %v1163 = vmul.f32 %v1099, %v1147
        %v1164 = vmul.f32 %v1100, %v1148
        %v1165 = vmul.f32 %v1101, %v1149
        %v1166 = vmul.f32 %v1102, %v1150
        %v1167 = vmul.f32 %v1103, %v1151
        %v1168 = vmul.f32 %v1104, %v1152
        %v1169 = vmul.f32 %v1105, %v1153
        %v1170 = vmul.f32 %v1106, %v1154
        %v1171 = vmul.f32 %v1107, %v1155
        %v1172 = vmul.f32 %v1108, %v1156
        %v1173 = vmul.f32 %v1109, %v1157
        %v1174 = vmul.f32 %v1110, %v1158
        %v1175 = vpack.c.bf16 %v1160, %v1159
        %v1176 = vpack.c.bf16 %v1162, %v1161
        %v1177 = vpack.c.bf16 %v1164, %v1163
        %v1178 = vpack.c.bf16 %v1166, %v1165
        %v1179 = vpack.c.bf16 %v1168, %v1167
        %v1180 = vpack.c.bf16 %v1170, %v1169
        %v1181 = vpack.c.bf16 %v1172, %v1171
        %v1182 = vpack.c.bf16 %v1174, %v1173
        %v1183 = vld [vmem:[%s660] sm:$0xf]
        %v1184 = vld [vmem:[%s660 + $0x4] sm:$0xf]
        %v1185 = vld [vmem:[%s660 + $0x8] sm:$0xf]
        %v1186 = vld [vmem:[%s660 + $0xc] sm:$0xf]
        %v1187 = vld [vmem:[%s660 + $0x10] sm:$0xf]
        %v1188 = vld [vmem:[%s660 + $0x14] sm:$0xf]
        %v1189 = vld [vmem:[%s660 + $0x18] sm:$0xf]
        %v1190 = vld [vmem:[%s660 + $0x1c] sm:$0xf]
        %v1191 = vld [vmem:[%s660 + $0x20] sm:$0xf]
        %v1192 = vld [vmem:[%s660 + $0x24] sm:$0xf]
        %v1193 = vld [vmem:[%s660 + $0x28] sm:$0xf]
        %v1194 = vld [vmem:[%s660 + $0x2c] sm:$0xf]
        %v1195 = vld [vmem:[%s660 + $0x30] sm:$0xf]
        %v1196 = vld [vmem:[%s660 + $0x34] sm:$0xf]
        %v1197 = vld [vmem:[%s660 + $0x38] sm:$0xf]
        %v1198 = vld [vmem:[%s660 + $0x3c] sm:$0xf]
        %v1199 = vld [vmem:[%s665] sm:$0xff]
        %v1200 = vld [vmem:[%s665 + $0x8] sm:$0xff]
        %1202 = vset.pattern.permute.xlu0 0
        %1203 = vperm.xlu0 %1202, %v1199
        %v1204 = vpop.permute.xlu0 %1203
        %1207 = vset.pattern.permute.xlu0 0
        %1208 = vperm.xlu0 %1207, %v1200
        %v1209 = vpop.permute.xlu0 %1208
        %v1227 = vunpack.c.l.b16 %v1183
        %v1228 = vunpack.c.l.b16 %v1184
        %v1229 = vunpack.c.l.b16 %v1185
        %v1230 = vunpack.c.l.b16 %v1186
        %v1231 = vunpack.c.l.b16 %v1187
        %v1232 = vunpack.c.l.b16 %v1188
        %v1233 = vunpack.c.l.b16 %v1189
        %v1234 = vunpack.c.l.b16 %v1190
        %v1235 = vunpack.c.l.b16 %v1191
        %v1236 = vunpack.c.l.b16 %v1192
        %v1237 = vunpack.c.l.b16 %v1193
        %v1238 = vunpack.c.l.b16 %v1194
        %v1239 = vunpack.c.l.b16 %v1195
        %v1240 = vunpack.c.l.b16 %v1196
        %v1241 = vunpack.c.l.b16 %v1197
        %v1242 = vunpack.c.l.b16 %v1198
        %v1243 = vpack.c.b16 %v1228, %v1227
        %v1244 = vpack.c.b16 %v1230, %v1229
        %v1245 = vpack.c.b16 %v1232, %v1231
        %v1246 = vpack.c.b16 %v1234, %v1233
        %v1247 = vpack.c.b16 %v1236, %v1235
        %v1248 = vpack.c.b16 %v1238, %v1237
        %v1249 = vpack.c.b16 %v1240, %v1239
        %v1250 = vpack.c.b16 %v1242, %v1241
        %1259 = vxpose.xlu0.c.b16.start [1/8] %v1243, 128
        %1260 = vxpose.xlu0.c.b16.cont [2/8] %v1244, 128
        %1261 = vxpose.xlu0.c.b16.cont [3/8] %v1245, 128
        %1262 = vxpose.xlu0.c.b16.cont [4/8] %v1246, 128
        %1263 = vxpose.xlu0.c.b16.cont [5/8] %v1247, 128
        %1264 = vxpose.xlu0.c.b16.cont [6/8] %v1248, 128
        %1265 = vxpose.xlu0.c.b16.cont [7/8] %v1249, 128
        %1266 = vxpose.xlu0.c.b16.end [8/8] %v1250, 128
        %v1267 = vpop.trf.xlu0
        %v1268 = vpop.trf.xlu0
        %v1269 = vpop.trf.xlu0
        %v1270 = vpop.trf.xlu0
        %v1271 = vpop.trf.xlu0
        %v1272 = vpop.trf.xlu0
        %v1273 = vpop.trf.xlu0
        %v1274 = vpop.trf.xlu0
        %1275 = vmatprep.subr.bf16.mxu0 0
        %1276 = vmatpush1.bf16.msra.mxu0 %v1182
        %1277 = vmatprep.subr.bf16.mxu0 0
        %1278 = vmatpush1.bf16.msra.mxu0 %v1181
        %1279 = vmatprep.subr.bf16.mxu0 0
        %1280 = vmatpush1.bf16.msra.mxu0 %v1180
        %1281 = vmatprep.subr.bf16.mxu0 0
        %1282 = vmatpush1.bf16.msra.mxu0 %v1179
        %1283 = vmatprep.subr.bf16.mxu0 0
        %1284 = vmatpush1.bf16.msra.mxu0 %v1178
        %1285 = vmatprep.subr.bf16.mxu0 0
        %1286 = vmatpush1.bf16.msra.mxu0 %v1177
        %1287 = vmatprep.subr.bf16.mxu0 0
        %1288 = vmatpush1.bf16.msra.mxu0 %v1176
        %1289 = vmatprep.subr.bf16.mxu0 0
        %1290 = vmatpush1.bf16.msra.mxu0 %v1175
        %1291 = vmatprep.subr.bf16.mxu0 0
        %1292 = vmatpush2.bf16.msra.mxu0 0
        %1293 = vmatprep.subr.bf16.mxu0 0
        %1294 = vmatpush2.bf16.msra.mxu0 0
        %1295 = vmatprep.subr.bf16.mxu0 0
        %1296 = vmatpush2.bf16.msra.mxu0 0
        %1297 = vmatprep.subr.bf16.mxu0 0
        %1298 = vmatpush2.bf16.msra.mxu0 0
        %1299 = vmatprep.subr.bf16.mxu0 0
        %1300 = vmatpush2.bf16.msra.mxu0 0
        %1301 = vmatprep.subr.bf16.mxu0 0
        %1302 = vmatpush2.bf16.msra.mxu0 0
        %1303 = vmatprep.subr.bf16.mxu0 0
        %1304 = vmatpush2.bf16.msra.mxu0 0
        %1305 = vmatprep.subr.bf16.mxu0 0
        %1306 = vmatpush2.bf16.msra.mxu0 0
        %1307 = vmatprep.mubr.bf16.mxu0 0
        %1308 = vmatmul.mubr.bf16.gmra.mxu0 %v1267
        %v1309 = vpop.f32.mrf.mxu0
        %v1310 = vadd.f32 %v1204, %v1309
        %v1311 = vpop.f32.mrf.mxu0
        %v1312 = vpop.f32.mrf.mxu0
        %v1313 = vadd.f32 %v1209, %v1312
        %v1314 = vpop.f32.mrf.mxu0
        %1315 = vdwg.mxu0
        %v1316 = vmul.f32 %v1310, %v691
        %v1317 = vmul.f32 %v1313, %v691
        %v1318 = vadd.f32 %v811, %v1316
        %v1319 = vadd.f32 %v812, %v1317
        %v1320 = vld [vmem:[%s669] sm:$0x3]
        %v1321 = vmul.f32 %v1318, %v691
        %v1322 = vmul.f32 %v1319, %v691
        %1323 = vadd.xlane.f32.xlu0 %v1321
        %v1324 = vpop.xlane.xlu0 %1323
        %1325 = vadd.xlane.f32.xlu0 %v1322
        %v1326 = vpop.xlane.xlu0 %1325
        %v1327 = vmul.f32 %v1324, 0.03125
        %v1328 = vmul.f32 %v1326, 0.03125
        %v1329 = vsub.f32 %v1318, %v1327
        %v1330 = vsub.f32 %v1319, %v1328
        %v1331 = vmul.f32 %v1329, %v691
        %v1332 = vmul.f32 %v1330, %v691
        %v1333 = vmul.f32 %v1331, %v1331
        %v1334 = vmul.f32 %v1332, %v1332
        %1335 = vadd.xlane.f32.xlu0 %v1333
        %v1336 = vpop.xlane.xlu0 %1335
        %1337 = vadd.xlane.f32.xlu0 %v1334
        %v1338 = vpop.xlane.xlu0 %1337
        %v1339 = vmul.f32 %v1336, 0.03125
        %v1340 = vmul.f32 %v1338, 0.03125
        %v1341 = vadd.f32 %v1339, 1e-06
        %v1342 = vadd.f32 %v1340, 1e-06
        %v1343 = vrsqrt.pop %v1341
        %v1344 = vrsqrt.pop %v1342
        %v1345 = vmul.f32 %v1331, %v1343
        %v1346 = vmul.f32 %v1332, %v1344
        %v1347 = vlaneseq
        %v1348 = vshrl.u32 %v1347, 7
        %v1349 = vsub.s32 0, %v1348
        %v1350 = vrot.slane %v1320, %v1349
        %v1351 = vmul.f32 %v1345, %v1350
        %v1352 = vmul.f32 %v1346, %v1350
        %v1353 = vlaneseq
        %v1354 = vshrl.u32 %v1353, 7
        %v1355 = vsub.s32 1, %v1354
        %v1356 = vrot.slane %v1320, %v1355
        %v1357 = vadd.f32 %v1351, %v1356
        %v1358 = vadd.f32 %v1352, %v1356
        %v1359 = vpack.c.bf16 %v1358, %v1357
        %v1360 = vld [vmem:[%s674] sm:$0xf]
        %v1361 = vld [vmem:[%s674 + $0x4] sm:$0xf]
        %v1362 = vld [vmem:[%s674 + $0x8] sm:$0xf]
        %v1363 = vld [vmem:[%s674 + $0xc] sm:$0xf]
        %v1364 = vld [vmem:[%s674 + $0x10] sm:$0xf]
        %v1365 = vld [vmem:[%s674 + $0x14] sm:$0xf]
        %v1366 = vld [vmem:[%s674 + $0x18] sm:$0xf]
        %v1367 = vld [vmem:[%s674 + $0x1c] sm:$0xf]
        %v1368 = vld [vmem:[%s674 + $0x20] sm:$0xf]
        %v1369 = vld [vmem:[%s674 + $0x24] sm:$0xf]
        %v1370 = vld [vmem:[%s674 + $0x28] sm:$0xf]
        %v1371 = vld [vmem:[%s674 + $0x2c] sm:$0xf]
        %v1372 = vld [vmem:[%s674 + $0x30] sm:$0xf]
        %v1373 = vld [vmem:[%s674 + $0x34] sm:$0xf]
        %v1374 = vld [vmem:[%s674 + $0x38] sm:$0xf]
        %v1375 = vld [vmem:[%s674 + $0x3c] sm:$0xf]
        %v1376 = vld [vmem:[%s677] sm:$0x1]
        %v1378 = vlaneseq
        %v1379 = vshrl.u32 %v1378, 7
        %v1380 = vsub.s32 0, %v1379
        %v1381 = vrot.slane %v1376, %v1380
        %v1399 = vunpack.c.l.b16 %v1360
        %v1400 = vunpack.c.l.b16 %v1361
        %v1401 = vunpack.c.l.b16 %v1362
        %v1402 = vunpack.c.l.b16 %v1363
        %v1403 = vunpack.c.l.b16 %v1364
        %v1404 = vunpack.c.l.b16 %v1365
        %v1405 = vunpack.c.l.b16 %v1366
        %v1406 = vunpack.c.l.b16 %v1367
        %v1407 = vunpack.c.l.b16 %v1368
        %v1408 = vunpack.c.l.b16 %v1369
        %v1409 = vunpack.c.l.b16 %v1370
        %v1410 = vunpack.c.l.b16 %v1371
        %v1411 = vunpack.c.l.b16 %v1372
        %v1412 = vunpack.c.l.b16 %v1373
        %v1413 = vunpack.c.l.b16 %v1374
        %v1414 = vunpack.c.l.b16 %v1375
        %v1415 = vpack.c.b16 %v1400, %v1399
        %v1416 = vpack.c.b16 %v1402, %v1401
        %v1417 = vpack.c.b16 %v1404, %v1403
        %v1418 = vpack.c.b16 %v1406, %v1405
        %v1419 = vpack.c.b16 %v1408, %v1407
        %v1420 = vpack.c.b16 %v1410, %v1409
        %v1421 = vpack.c.b16 %v1412, %v1411
        %v1422 = vpack.c.b16 %v1414, %v1413
        %1431 = vmatprep.subr.bf16.mxu0 0
        %1432 = vmatpush1.bf16.msra.mxu0 %v1422
        %1433 = vmatprep.subr.bf16.mxu0 0
        %1434 = vmatpush1.bf16.msra.mxu0 %v1421
        %1435 = vmatprep.subr.bf16.mxu0 0
        %1436 = vmatpush1.bf16.msra.mxu0 %v1420
        %1437 = vmatprep.subr.bf16.mxu0 0
        %1438 = vmatpush1.bf16.msra.mxu0 %v1419
        %1439 = vmatprep.subr.bf16.mxu0 0
        %1440 = vmatpush1.bf16.msra.mxu0 %v1418
        %1441 = vmatprep.subr.bf16.mxu0 0
        %1442 = vmatpush1.bf16.msra.mxu0 %v1417
        %1443 = vmatprep.subr.bf16.mxu0 0
        %1444 = vmatpush1.bf16.msra.mxu0 %v1416
        %1445 = vmatprep.subr.bf16.mxu0 0
        %1446 = vmatpush1.bf16.msra.mxu0 %v1415
        %1447 = vmatprep.subr.bf16.mxu0 0
        %1448 = vmatpush2.bf16.msra.mxu0 0
        %1449 = vmatprep.subr.bf16.mxu0 0
        %1450 = vmatpush2.bf16.msra.mxu0 0
        %1451 = vmatprep.subr.bf16.mxu0 0
        %1452 = vmatpush2.bf16.msra.mxu0 0
        %1453 = vmatprep.subr.bf16.mxu0 0
        %1454 = vmatpush2.bf16.msra.mxu0 0
        %1455 = vmatprep.subr.bf16.mxu0 0
        %1456 = vmatpush2.bf16.msra.mxu0 0
        %1457 = vmatprep.subr.bf16.mxu0 0
        %1458 = vmatpush2.bf16.msra.mxu0 0
        %1459 = vmatprep.subr.bf16.mxu0 0
        %1460 = vmatpush2.bf16.msra.mxu0 0
        %1461 = vmatprep.subr.bf16.mxu0 0
        %1462 = vmatpush2.bf16.msra.mxu0 0
        %1463 = vmatprep.mubr.bf16.mxu0 0
        %1464 = vmatmul.mubr.bf16.gmra.mxu0 %v1359
        %v1465 = vpop.f32.mrf.mxu0
        %v1466 = vadd.f32 %v1381, %v1465
        %v1467 = vpop.f32.mrf.mxu0
        %v1468 = vpop.f32.mrf.mxu0
        %v1469 = vadd.f32 %v1381, %v1468
        %v1470 = vpop.f32.mrf.mxu0
        %1471 = vdwg.mxu0
        %v1472 = vmul.f32 %v1466, 0.5
        %v1473 = vmul.f32 %v1469, 0.5
        %v1474 = vmul.f32 %v1466, 0.70710677
        %v1475 = vmul.f32 %v1469, 0.70710677
        %v1476 = verf.f32.pop %v1474
        %v1477 = verf.f32.pop %v1475
        %v1478 = vadd.f32 %v1476, 1.0
        %v1479 = vadd.f32 %v1477, 1.0
        %v1480 = vmul.f32 %v1472, %v1478
        %v1481 = vmul.f32 %v1473, %v1479
        %v1482 = vpack.c.bf16 %v1481, %v1480
        %v1483 = vld [vmem:[%s682] sm:$0xf]
        %v1484 = vld [vmem:[%s682 + $0x4] sm:$0xf]
        %v1485 = vld [vmem:[%s682 + $0x8] sm:$0xf]
        %v1486 = vld [vmem:[%s682 + $0xc] sm:$0xf]
        %v1487 = vld [vmem:[%s682 + $0x10] sm:$0xf]
        %v1488 = vld [vmem:[%s682 + $0x14] sm:$0xf]
        %v1489 = vld [vmem:[%s682 + $0x18] sm:$0xf]
        %v1490 = vld [vmem:[%s682 + $0x1c] sm:$0xf]
        %v1491 = vld [vmem:[%s682 + $0x20] sm:$0xf]
        %v1492 = vld [vmem:[%s682 + $0x24] sm:$0xf]
        %v1493 = vld [vmem:[%s682 + $0x28] sm:$0xf]
        %v1494 = vld [vmem:[%s682 + $0x2c] sm:$0xf]
        %v1495 = vld [vmem:[%s682 + $0x30] sm:$0xf]
        %v1496 = vld [vmem:[%s682 + $0x34] sm:$0xf]
        %v1497 = vld [vmem:[%s682 + $0x38] sm:$0xf]
        %v1498 = vld [vmem:[%s682 + $0x3c] sm:$0xf]
        %v1515 = vunpack.c.l.b16 %v1483
        %v1516 = vunpack.c.l.b16 %v1484
        %v1517 = vunpack.c.l.b16 %v1485
        %v1518 = vunpack.c.l.b16 %v1486
        %v1519 = vunpack.c.l.b16 %v1487
        %v1520 = vunpack.c.l.b16 %v1488
        %v1521 = vunpack.c.l.b16 %v1489
        %v1522 = vunpack.c.l.b16 %v1490
        %v1523 = vunpack.c.l.b16 %v1491
        %v1524 = vunpack.c.l.b16 %v1492
        %v1525 = vunpack.c.l.b16 %v1493
        %v1526 = vunpack.c.l.b16 %v1494
        %v1527 = vunpack.c.l.b16 %v1495
        %v1528 = vunpack.c.l.b16 %v1496
        %v1529 = vunpack.c.l.b16 %v1497
        %v1530 = vunpack.c.l.b16 %v1498
        %v1531 = vpack.c.b16 %v1516, %v1515
        %v1532 = vpack.c.b16 %v1518, %v1517
        %v1533 = vpack.c.b16 %v1520, %v1519
        %v1534 = vpack.c.b16 %v1522, %v1521
        %v1535 = vpack.c.b16 %v1524, %v1523
        %v1536 = vpack.c.b16 %v1526, %v1525
        %v1537 = vpack.c.b16 %v1528, %v1527
        %v1538 = vpack.c.b16 %v1530, %v1529
        %1547 = vmatprep.subr.bf16.mxu0 0
        %1548 = vmatpush1.bf16.msra.mxu0 %v1538
        %1549 = vmatprep.subr.bf16.mxu0 0
        %1550 = vmatpush1.bf16.msra.mxu0 %v1537
        %1551 = vmatprep.subr.bf16.mxu0 0
        %1552 = vmatpush1.bf16.msra.mxu0 %v1536
        %1553 = vmatprep.subr.bf16.mxu0 0
        %1554 = vmatpush1.bf16.msra.mxu0 %v1535
        %1555 = vmatprep.subr.bf16.mxu0 0
        %1556 = vmatpush1.bf16.msra.mxu0 %v1534
        %1557 = vmatprep.subr.bf16.mxu0 0
        %1558 = vmatpush1.bf16.msra.mxu0 %v1533
        %1559 = vmatprep.subr.bf16.mxu0 0
        %1560 = vmatpush1.bf16.msra.mxu0 %v1532
        %1561 = vmatprep.subr.bf16.mxu0 0
        %1562 = vmatpush1.bf16.msra.mxu0 %v1531
        %1563 = vmatprep.subr.bf16.mxu0 0
        %1564 = vmatpush2.bf16.msra.mxu0 0
        %1565 = vmatprep.subr.bf16.mxu0 0
        %1566 = vmatpush2.bf16.msra.mxu0 0
        %1567 = vmatprep.subr.bf16.mxu0 0
        %1568 = vmatpush2.bf16.msra.mxu0 0
        %1569 = vmatprep.subr.bf16.mxu0 0
        %1570 = vmatpush2.bf16.msra.mxu0 0
        %1571 = vmatprep.subr.bf16.mxu0 0
        %1572 = vmatpush2.bf16.msra.mxu0 0
        %1573 = vmatprep.subr.bf16.mxu0 0
        %1574 = vmatpush2.bf16.msra.mxu0 0
        %1575 = vmatprep.subr.bf16.mxu0 0
        %1576 = vmatpush2.bf16.msra.mxu0 0
        %1577 = vmatprep.subr.bf16.mxu0 0
        %1578 = vmatpush2.bf16.msra.mxu0 0
        %1579 = vmatprep.mubr.bf16.mxu0 0
        %1580 = vmatmul.mubr.bf16.gmra.mxu0 %v1482
        %v1581 = vpop.f32.mrf.mxu0
        %v1582 = vadd.f32 0.0, %v1581
        %v1583 = vpop.f32.mrf.mxu0
        %v1584 = vpop.f32.mrf.mxu0
        %v1585 = vadd.f32 0.0, %v1584
        %v1586 = vpop.f32.mrf.mxu0
        %1587 = vdwg.mxu0
        %v1588 = vadd.f32 %v1318, %v1582
        %v1589 = vadd.f32 %v1319, %v1585
        %v1590 = vld [vmem:[%s685] sm:$0x1]
        %v1592 = vlaneseq
        %v1593 = vshrl.u32 %v1592, 7
        %v1594 = vsub.s32 0, %v1593
        %v1595 = vrot.slane %v1590, %v1594
        %v1597 = vadd.f32 %v1588, %v1595
        %v1598 = vadd.f32 %v1589, %v1595
        %1599 = vst [vmem:[#allocation2] sm:$0xff] %v1597
        %1600 = vst [vmem:[#allocation2 + $0x8] sm:$0xff] %v1598
        %p1601 = scmp.eq.s32.totalorder %s34, 1
        // Predicated region
        $region85: #{tpu_custom_call.1} parent=79 // pred_check
          %p1602 = pneg %p1601
        $region86: #{tpu_custom_call.1} parent=79 // pred_check_branch
          %1604 = sbr.rel (%p1602) target = $region88
        $region87: #{tpu_custom_call.1} parent=79 // pred_region
          %v1605 = vld [vmem:[%s12] sm:$0x3]
          %v1606 = vmul.f32 %v1597, %v691
          %v1607 = vmul.f32 %v1598, %v691
          %1608 = vadd.xlane.f32.xlu0 %v1606
          %v1609 = vpop.xlane.xlu0 %1608
          %1610 = vadd.xlane.f32.xlu0 %v1607
          %v1611 = vpop.xlane.xlu0 %1610
          %v1612 = vmul.f32 %v1609, 0.03125
          %v1613 = vmul.f32 %v1611, 0.03125
          %v1614 = vsub.f32 %v1597, %v1612
          %v1615 = vsub.f32 %v1598, %v1613
          %v1616 = vmul.f32 %v1614, %v691
          %v1617 = vmul.f32 %v1615, %v691
          %v1618 = vmul.f32 %v1616, %v1616
          %v1619 = vmul.f32 %v1617, %v1617
          %1620 = vadd.xlane.f32.xlu0 %v1618
          %v1621 = vpop.xlane.xlu0 %1620
          %1622 = vadd.xlane.f32.xlu0 %v1619
          %v1623 = vpop.xlane.xlu0 %1622
          %v1624 = vmul.f32 %v1621, 0.03125
          %v1625 = vmul.f32 %v1623, 0.03125
          %v1626 = vadd.f32 %v1624, 1e-06
          %v1627 = vadd.f32 %v1625, 1e-06
          %v1628 = vrsqrt.pop %v1626
          %v1629 = vrsqrt.pop %v1627
          %v1630 = vmul.f32 %v1616, %v1628
          %v1631 = vmul.f32 %v1617, %v1629
          %v1632 = vlaneseq
          %v1633 = vshrl.u32 %v1632, 7
          %v1634 = vsub.s32 0, %v1633
          %v1635 = vrot.slane %v1605, %v1634
          %v1636 = vmul.f32 %v1630, %v1635
          %v1637 = vmul.f32 %v1631, %v1635
          %v1638 = vlaneseq
          %v1639 = vshrl.u32 %v1638, 7
          %v1640 = vsub.s32 1, %v1639
          %v1641 = vrot.slane %v1605, %v1640
          %v1642 = vadd.f32 %v1636, %v1641
          %v1643 = vadd.f32 %v1637, %v1641
          %v1644 = vadd.f32 %v1642, %v1643
          %v1645 = vrot.slane %v1644, 4
          %v1646 = vadd.f32 %v1644, %v1645
          %v1647 = vrot.slane %v1646, 2
          %v1648 = vadd.f32 %v1646, %v1647
          %v1649 = vrot.slane %v1648, 1
          %v1650 = vadd.f32 %v1648, %v1649
          %v1651 = vrcp.pop 16.0
          %v1652 = vmul.f32 %v1650, %v1651
          %v1653 = vpack.c.bf16 %v1652, %v1652
          %v1654 = vld [vmem:[%s13] sm:$0xf]
          %v1655 = vld [vmem:[%s13 + $0x4] sm:$0xf]
          %v1656 = vld [vmem:[%s13 + $0x8] sm:$0xf]
          %v1657 = vld [vmem:[%s13 + $0xc] sm:$0xf]
          %v1658 = vld [vmem:[%s13 + $0x10] sm:$0xf]
          %v1659 = vld [vmem:[%s13 + $0x14] sm:$0xf]
          %v1660 = vld [vmem:[%s13 + $0x18] sm:$0xf]
          %v1661 = vld [vmem:[%s13 + $0x1c] sm:$0xf]
          %v1662 = vld [vmem:[%s13 + $0x20] sm:$0xf]
          %v1663 = vld [vmem:[%s13 + $0x24] sm:$0xf]
          %v1664 = vld [vmem:[%s13 + $0x28] sm:$0xf]
          %v1665 = vld [vmem:[%s13 + $0x2c] sm:$0xf]
          %v1666 = vld [vmem:[%s13 + $0x30] sm:$0xf]
          %v1667 = vld [vmem:[%s13 + $0x34] sm:$0xf]
          %v1668 = vld [vmem:[%s13 + $0x38] sm:$0xf]
          %v1669 = vld [vmem:[%s13 + $0x3c] sm:$0xf]
          %v1670 = vld [vmem:[%s14] sm:$0x1]
          %v1687 = vunpack.c.l.b16 %v1654
          %v1688 = vunpack.c.l.b16 %v1655
          %v1689 = vunpack.c.l.b16 %v1656
          %v1690 = vunpack.c.l.b16 %v1657
          %v1691 = vunpack.c.l.b16 %v1658
          %v1692 = vunpack.c.l.b16 %v1659
          %v1693 = vunpack.c.l.b16 %v1660
          %v1694 = vunpack.c.l.b16 %v1661
          %v1695 = vunpack.c.l.b16 %v1662
          %v1696 = vunpack.c.l.b16 %v1663
          %v1697 = vunpack.c.l.b16 %v1664
          %v1698 = vunpack.c.l.b16 %v1665
          %v1699 = vunpack.c.l.b16 %v1666
          %v1700 = vunpack.c.l.b16 %v1667
          %v1701 = vunpack.c.l.b16 %v1668
          %v1702 = vunpack.c.l.b16 %v1669
          %v1703 = vpack.c.b16 %v1688, %v1687
          %v1704 = vpack.c.b16 %v1690, %v1689
          %v1705 = vpack.c.b16 %v1692, %v1691
          %v1706 = vpack.c.b16 %v1694, %v1693
          %v1707 = vpack.c.b16 %v1696, %v1695
          %v1708 = vpack.c.b16 %v1698, %v1697
          %v1709 = vpack.c.b16 %v1700, %v1699
          %v1710 = vpack.c.b16 %v1702, %v1701
          %1719 = vmatprep.subr.bf16.mxu0 0
          %1720 = vmatpush1.bf16.msra.mxu0 %v1710
          %1721 = vmatprep.subr.bf16.mxu0 0
          %1722 = vmatpush1.bf16.msra.mxu0 %v1709
          %1723 = vmatprep.subr.bf16.mxu0 0
          %1724 = vmatpush1.bf16.msra.mxu0 %v1708
          %1725 = vmatprep.subr.bf16.mxu0 0
          %1726 = vmatpush1.bf16.msra.mxu0 %v1707
          %1727 = vmatprep.subr.bf16.mxu0 0
          %1728 = vmatpush1.bf16.msra.mxu0 %v1706
          %1729 = vmatprep.subr.bf16.mxu0 0
          %1730 = vmatpush1.bf16.msra.mxu0 %v1705
          %1731 = vmatprep.subr.bf16.mxu0 0
          %1732 = vmatpush1.bf16.msra.mxu0 %v1704
          %1733 = vmatprep.subr.bf16.mxu0 0
          %1734 = vmatpush1.bf16.msra.mxu0 %v1703
          %1735 = vmatprep.subr.bf16.mxu0 0
          %1736 = vmatpush2.bf16.msra.mxu0 0
          %1737 = vmatprep.subr.bf16.mxu0 0
          %1738 = vmatpush2.bf16.msra.mxu0 0
          %1739 = vmatprep.subr.bf16.mxu0 0
          %1740 = vmatpush2.bf16.msra.mxu0 0
          %1741 = vmatprep.subr.bf16.mxu0 0
          %1742 = vmatpush2.bf16.msra.mxu0 0
          %1743 = vmatprep.subr.bf16.mxu0 0
          %1744 = vmatpush2.bf16.msra.mxu0 0
          %1745 = vmatprep.subr.bf16.mxu0 0
          %1746 = vmatpush2.bf16.msra.mxu0 0
          %1747 = vmatprep.subr.bf16.mxu0 0
          %1748 = vmatpush2.bf16.msra.mxu0 0
          %1749 = vmatprep.subr.bf16.mxu0 0
          %1750 = vmatpush2.bf16.msra.mxu0 0
          %1751 = vmatprep.mubr.bf16.mxu0 0
          %1752 = vmatmul.mubr.bf16.gmra.mxu0 %v1653
          %v1753 = vpop.f32.mrf.mxu0
          %v1754 = vadd.f32 %v1670, %v1753
          %v1755 = vpop.f32.mrf.mxu0
          %v1756 = vpop.f32.mrf.mxu0
          %v1757 = vpop.f32.mrf.mxu0
          %1758 = vdwg.mxu0
          %1759 = vst [vmem:[%s636] sm:$0x1] %v1754
        $region88: #{tpu_custom_call.1} parent=79 // pred_fallthru
          _
        %s1760 = sand.u32 %s419, 1
        %s1761 = scalar_lea.sflag [#allocation4], %s1760
        %s1762 = sand.u32 %s419, 1
        %s1763 = scalar_lea.vmem [#allocation3], %s1762
        // Predicated region
        $region89: #{tpu_custom_call.1} parent=79 // pred_check
          %p1764 = pneg %p429
        $region90: #{tpu_custom_call.1} parent=79 // pred_check_branch
          %1766 = sbr.rel (%p1764) target = $region92
        $region91: #{tpu_custom_call.1} parent=79 // pred_region
          %s1768 = ssub.s32 16, 16
          %1769 = vsyncadd %s1761, %s1768
          %s1770 = smul.addr %s33, 16
          %s1771 = scalar_lea.hbm %s15, %s1770
          %s1773 = sshll.u32 %s1763, 4
          %s1774 = int_to_ptr.vmem [resolvable:$true] %s1773
          %1776 = dma.vmem_to_hbm [thread:$0]  %s1774, 16, %s1771, %s1761
        $region92: #{tpu_custom_call.1} parent=79 // pred_fallthru
          _
      $region80: #{tpu_custom_call.1} parent=5 // pred_fallthru
        _
      %p1777 = scmp.le.s32.totalorder 2, %s24
      // Predicated region
      $region93: #{tpu_custom_call.1} parent=5 // pred_check
        %p1778 = pneg %p1777
      $region94: #{tpu_custom_call.1} parent=5 // pred_check_branch
        %1780 = sbr.rel (%p1778) target = $region96
      $region95: #{tpu_custom_call.1} parent=5 // pred_region
        %s1781 = ssub.s32 %s24, 2
        // Predicated region
        $region97: #{tpu_custom_call.1} parent=95 // pred_check
          %p1782 = pneg %p435
        $region98: #{tpu_custom_call.1} parent=95 // pred_check_branch
          %1784 = sbr.rel (%p1782) target = $region100
        $region99: #{tpu_custom_call.1} parent=95 // pred_region
          %s1785 = sand.u32 %s420, 1
          %s1786 = scalar_lea.sflag [#allocation4], %s1785
          %s1787 = sand.u32 %s420, 1
          %s1788 = scalar_lea.vmem [#allocation3], %s1787
          %1789 = dma.done %s1786, 16
        $region100: #{tpu_custom_call.1} parent=95 // pred_fallthru
          _
      $region96: #{tpu_custom_call.1} parent=5 // pred_fallthru
        _
    $region6: #{tpu_custom_call.1} parent=1 // loop_footer
      %s28 = sadd.s32 1, %s24
    $region7: #{tpu_custom_call.1} parent=1 // loop_footer_branch
      %23 = sbr.rel target = $region3
    $region8: #{tpu_custom_call.1} parent=1 // loop_exit
      _
    %1790 = vsyncpa [#allocation4], 1
    %s1791 = scalar_lea.sflag [#allocation4], 1
    %1792 = vsyncpa %s1791, 1

</llo_original>
